<compile_context>
chip_gen: v6e
topology: v6e:2x2x1
jax: 0.10.0
libtpu: 0.0.40
codegen_flags: <defaults>
</compile_context>

<pallas_src>
import functools
import math

import jax
import jax.numpy as jnp
from jax import lax
from jax.experimental import pallas as pl
from jax.experimental.pallas import tpu as pltpu

LANE = 128
_EPS = 1e-8  # nn.CosineSimilarity eps


# ----------------------------- shared math helper -----------------------------

def _layernorm(x, gamma, beta, eps=1e-5):
    mu = x.mean(axis=-1, keepdims=True)
    var = ((x - mu) ** 2).mean(axis=-1, keepdims=True)
    return (x - mu) * lax.rsqrt(var + eps) * gamma + beta


# --------------------------------- kernel -------------------------------------

def dual_encoder_kernel(x_ref, mask_ref, w_ref, vec_ref, out_ref,
                        *, B, Sq, Sp, H, F):
    """Fused dual-encoder forward (single grid step).

    x_ref   : (B*Sq + B*Sp, H) f32  -- query rows (batch-major) then paragraph rows
    mask_ref: (2*B, 128)       f32  -- additive key bias; row b = query batch b
                                       (lanes [0,Sq)), row B+b = paragraph batch b
    w_ref   : (6*H + 2*F, 128) bf16 -- [Wqkv_q;Wqkv_p | Wo_q;Wo_p | W1_q;W1_p | W2_q;W2_p],
                                       columns zero-padded to 128 (lane-dense loads)
    vec_ref : (16, 128)        f32  -- rows 0..7 query / 8..15 paragraph:
                                       [bqkv, bo, b1, b2, g1, be1, g2, be2]
    out_ref : (B, 128)         f32  -- cosine similarity broadcast over lanes
    """
    NQ, NP = B * Sq, B * Sp
    N = NQ + NP

    x = x_ref[...]                      # (N, H) f32
    mask = mask_ref[...]                # (2B, 128) f32
    vec = vec_ref[...]                  # (16, 128) f32

    # row -> encoder selector (query rows come first)
    sel = lax.broadcasted_iota(jnp.int32, (N, 1), 0) < NQ          # (N, 1) bool

    def sel_vec(r, n):
        # per-row bias / gamma / beta (query rows use row r, paragraph rows r+8)
        return jnp.where(sel, vec[r:r + 1, 0:n], vec[r + 8:r + 9, 0:n])  # (N, n)

    def bdiag(m):
        # block-diagonal LHS [[m_q, 0], [0, m_p]] from row-stacked m (f32)
        z = jnp.zeros_like(m)
        return jnp.concatenate([jnp.where(sel, m, z), jnp.where(sel, z, m)], axis=1)

    def fused_mm(lhs_f32, row0, row1):
        # one MXU call serving both encoders; bf16 operands, f32 accumulation.
        lhs = bdiag(lhs_f32).astype(jnp.bfloat16)                  # (N, row1-row0)
        return jnp.dot(lhs, w_ref[row0:row1, :],
                       preferred_element_type=jnp.float32)         # (N, 128)

    # ---- fused QKV projection (both encoders, whole batch) --------------------
    qkv = fused_mm(x, 0, 2 * H)[:, 0:3 * H] + sel_vec(0, 3 * H)    # (N, 3H)
    q_all = qkv[:, 0:H]
    k_all = qkv[:, H:2 * H]
    v_all = qkv[:, 2 * H:3 * H]

    # ---- self-attention (per sequence; B is tiny & static -> unrolled) --------
    scale = jnp.float32(1.0 / math.sqrt(H))

    def _attend(r0, S, mrow):
        qb = q_all[r0:r0 + S, :].astype(jnp.bfloat16)
        kb = k_all[r0:r0 + S, :].astype(jnp.bfloat16)
        vb = v_all[r0:r0 + S, :].astype(jnp.bfloat16)
        s = lax.dot_general(qb, kb, (((1,), (1,)), ((), ())),
                            preferred_element_type=jnp.float32) * scale
        s = s + mask[mrow:mrow + 1, 0:S]
        s = s - s.max(axis=-1, keepdims=True)
        p = jnp.exp(s)
        p = p * pl.reciprocal(p.sum(axis=-1, keepdims=True), approx=True)
        return jnp.dot(p.astype(jnp.bfloat16), vb,
                       preferred_element_type=jnp.float32)          # (S, H) f32

    ctx_parts = []
    for b in range(B):                          # query sequences
        ctx_parts.append(_attend(b * Sq, Sq, b))
    for b in range(B):                          # paragraph sequences
        ctx_parts.append(_attend(NQ + b * Sp, Sp, B + b))
    ctx = jnp.concatenate(ctx_parts, axis=0)                        # (N, H) f32

    # ---- attention output projection + residual + LN1 (f32 elementwise) -------
    attn_out = fused_mm(ctx, 2 * H, 4 * H)[:, 0:H] + sel_vec(1, H)
    h1 = _layernorm(x + attn_out, sel_vec(4, H), sel_vec(5, H))

    # ---- FFN + residual + LN2 --------------------------------------------------
    ff1 = fused_mm(h1, 4 * H, 6 * H)[:, 0:F] + sel_vec(2, F)
    act = jax.nn.gelu(ff1)
    ff2 = fused_mm(act, 6 * H, 6 * H + 2 * F)[:, 0:H] + sel_vec(3, H)
    h2 = _layernorm(h1 + ff2, sel_vec(6, H), sel_vec(7, H))         # (N, H)

    # ---- mean pooling (matches last_hidden_state.mean(dim=1), padded tokens
    #      included) + nn.CosineSimilarity(dim=1, eps=1e-8) ----------------------
    rows = []
    for b in range(B):
        qe = jnp.mean(h2[b * Sq:(b + 1) * Sq, :], axis=0, keepdims=True)        # (1,H)
        pe = jnp.mean(h2[NQ + b * Sp:NQ + (b + 1) * Sp, :], axis=0, keepdims=True)
        d = jnp.sum(qe * pe, axis=-1, keepdims=True)                 # (1,1)
        qn = jnp.sqrt(jnp.sum(qe * qe, axis=-1, keepdims=True))
        pn = jnp.sqrt(jnp.sum(pe * pe, axis=-1, keepdims=True))
        sim = d * pl.reciprocal(jnp.maximum(qn * pn, _EPS), approx=True)
        rows.append(jnp.broadcast_to(sim, (1, LANE)))
    out_ref[...] = jnp.concatenate(rows, axis=0)                     # (B, 128)


# ------------------------------ operand packing --------------------------------

def _pack_weight_slab(q_params, p_params, H, F):
    """bf16 (6H+2F, 128) slab; each fused matmul's RHS is a row-window with
    columns zero-padded to 128 so every weight load / MXU output is lane-dense."""
    qWqkv, _, qWo, _, qW1, _, qW2, _, _, _, _, _ = q_params
    pWqkv, _, pWo, _, pW1, _, pW2, _, _, _, _, _ = p_params
    w = jnp.zeros((6 * H + 2 * F, LANE), jnp.float32)
    w = w.at[0:H, 0:3 * H].set(qWqkv).at[H:2 * H, 0:3 * H].set(pWqkv)
    w = w.at[2 * H:3 * H, 0:H].set(qWo).at[3 * H:4 * H, 0:H].set(pWo)
    w = w.at[4 * H:5 * H, 0:F].set(qW1).at[5 * H:6 * H, 0:F].set(pW1)
    w = w.at[6 * H:6 * H + F, 0:H].set(qW2).at[6 * H + F:6 * H + 2 * F, 0:H].set(pW2)
    return w.astype(jnp.bfloat16)


_VEC_IDX = (1, 3, 5, 7, 8, 9, 10, 11)    # bqkv, bo, b1, b2, g1, be1, g2, be2


def _pack_vec_slab(q_params, p_params):
    v = jnp.zeros((16, LANE), jnp.float32)
    for r, idx in enumerate(_VEC_IDX):
        qa, pa = q_params[idx], p_params[idx]
        v = v.at[r:r + 1, 0:qa.shape[1]].set(qa)
        v = v.at[8 + r:8 + r + 1, 0:pa.shape[1]].set(pa)
    return v


def _pack_mask_bias(q_mask, p_mask):
    B, Sq = q_mask.shape
    _, Sp = p_mask.shape
    qb = (1.0 - q_mask.astype(jnp.float32)) * jnp.float32(-1e9)
    pb = (1.0 - p_mask.astype(jnp.float32)) * jnp.float32(-1e9)
    m = jnp.zeros((2 * B, LANE), jnp.float32)
    m = m.at[:B, :Sq].set(qb)
    m = m.at[B:, :Sp].set(pb)
    return m


# --------------------------------- wrapper -------------------------------------

def dual_encoder_forward(q_x, q_mask, p_x, p_mask, q_params, p_params):
    """q_x: (B,Sq,H) f32, q_mask: (B,Sq) {0,1}; p_x: (B,Sp,H); p_mask: (B,Sp)."""
    B, Sq, H = q_x.shape
    _, Sp, _ = p_x.shape
    F = q_params[4].shape[1]
    assert 3 * H <= LANE and F <= LANE, "packed slab layout assumes 3H, F <= 128"
    N = B * Sq + B * Sp

    x_cat = jnp.concatenate([q_x.reshape(B * Sq, H), p_x.reshape(B * Sp, H)], axis=0)
    mask_pack = _pack_mask_bias(q_mask, p_mask)
    w_slab = _pack_weight_slab(q_params, p_params, H, F)
    vec_slab = _pack_vec_slab(q_params, p_params)

    kernel = functools.partial(dual_encoder_kernel, B=B, Sq=Sq, Sp=Sp, H=H, F=F)

    out = pl.pallas_call(
        kernel,
        out_shape=jax.ShapeDtypeStruct((B, LANE), jnp.float32),
        grid_spec=pltpu.PrefetchScalarGridSpec(
            num_scalar_prefetch=0,
            grid=(1,),
            in_specs=[
                pl.BlockSpec((N, H), lambda i: (0, 0)),
                pl.BlockSpec((2 * B, LANE), lambda i: (0, 0)),
                pl.BlockSpec((6 * H + 2 * F, LANE), lambda i: (0, 0)),
                pl.BlockSpec((16, LANE), lambda i: (0, 0)),
            ],
            out_specs=pl.BlockSpec((B, LANE), lambda i: (0, 0)),
        ),
        compiler_params=pltpu.CompilerParams(
            dimension_semantics=("arbitrary",),
        ),
    )(x_cat, mask_pack, w_slab, vec_slab)
    return out[:, 0]   # (B,) cosine similarities


# --------------------------- pure-JAX reference ---------------------------------

def _encode_ref(x, mask, params):
    Wqkv, bqkv, Wo, bo, W1, b1, W2, b2, g1, be1, g2, be2 = params
    S, H = x.shape
    bias = (1.0 - mask.astype(jnp.float32))[None, :] * jnp.float32(-1e9)   # (1, S)
    qkv = x @ Wqkv + bqkv
    q, k, v = qkv[:, :H], qkv[:, H:2 * H], qkv[:, 2 * H:]
    s = (q @ k.T) * (1.0 / math.sqrt(H)) + bias
    p = jax.nn.softmax(s, axis=-1)
    attn_out = (p @ v) @ Wo + bo
    h1 = _layernorm(x + attn_out, g1, be1)
    ff = jax.nn.gelu(h1 @ W1 + b1) @ W2 + b2
    h2 = _layernorm(h1 + ff, g2, be2)
    return h2.mean(axis=0)                                                 # (H,)


def dual_encoder_ref(q_x, q_mask, p_x, p_mask, q_params, p_params):
    sims = []
    for b in range(q_x.shape[0]):
        qe = _encode_ref(q_x[b], q_mask[b], q_params)
        pe = _encode_ref(p_x[b], p_mask[b], p_params)
        denom = jnp.maximum(jnp.linalg.norm(qe) * jnp.linalg.norm(pe), _EPS)
        sims.append(jnp.dot(qe, pe) / denom)
    return jnp.stack(sims)


# ------------------------ deterministic parameter init --------------------------

def init_encoder_params(key, H, F):
    ks = jax.random.split(key, 4)
    s = jnp.float32(0.02)
    return [
        jax.random.normal(ks[0], (H, 3 * H), jnp.float32) * s,  # Wqkv
        jnp.zeros((1, 3 * H), jnp.float32),                     # bqkv
        jax.random.normal(ks[1], (H, H), jnp.float32) * s,      # Wo
        jnp.zeros((1, H), jnp.float32),                          # bo
        jax.random.normal(ks[2], (H, F), jnp.float32) * s,      # W1
        jnp.zeros((1, F), jnp.float32),                          # b1
        jax.random.normal(ks[3], (F, H), jnp.float32) * s,      # W2
        jnp.zeros((1, H), jnp.float32),                          # b2
        jnp.ones((1, H), jnp.float32),                           # ln1 gamma
        jnp.zeros((1, H), jnp.float32),                          # ln1 beta
        jnp.ones((1, H), jnp.float32),                           # ln2 gamma
        jnp.zeros((1, H), jnp.float32),                          # ln2 beta
    ]


def embed(ids, tok_emb, pos_emb):
    # Embedding lookup is glue (gather) in plain JAX; hot path stays in the kernel.
    return tok_emb[ids] + pos_emb[None, :, :]


# ----------------------------------- main ---------------------------------------

if __name__ == "__main__":
    B, Sq, Sp, H, F, V = 2, 8, 16, 32, 64, 100

    root = jax.random.PRNGKey(0)
    k_qids, k_pids, k_qtok, k_ptok, k_qpos, k_ppos, k_qenc, k_penc = jax.random.split(root, 8)

    query_input_ids = jax.random.randint(k_qids, (B, Sq), 0, V, dtype=jnp.int32)
    paragraph_input_ids = jax.random.randint(k_pids, (B, Sp), 0, V, dtype=jnp.int32)

    # deterministic attention masks with some padding on batch element 1
    query_attention_mask = jnp.ones((B, Sq), jnp.int32).at[1, Sq - 2:].set(0)
    paragraph_attention_mask = jnp.ones((B, Sp), jnp.int32).at[1, Sp - 4:].set(0)

    q_tok_emb = jax.random.normal(k_qtok, (V, H), jnp.float32) * 0.02
    p_tok_emb = jax.random.normal(k_ptok, (V, H), jnp.float32) * 0.02
    q_pos_emb = jax.random.normal(k_qpos, (Sq, H), jnp.float32) * 0.02
    p_pos_emb = jax.random.normal(k_ppos, (Sp, H), jnp.float32) * 0.02

    q_params = init_encoder_params(k_qenc, H, F)
    p_params = init_encoder_params(k_penc, H, F)

    q_x = embed(query_input_ids, q_tok_emb, q_pos_emb)        # (B, Sq, H)
    p_x = embed(paragraph_input_ids, p_tok_emb, p_pos_emb)    # (B, Sp, H)

    similarity = dual_encoder_forward(q_x, query_attention_mask,
                                      p_x, paragraph_attention_mask,
                                      q_params, p_params)
    similarity = jax.block_until_ready(similarity)

    reference = dual_encoder_ref(q_x, query_attention_mask,
                                 p_x, paragraph_attention_mask,
                                 q_params, p_params)

    assert similarity.shape == (B,)
    assert bool(jnp.all(jnp.isfinite(similarity)))
    assert bool(jnp.all(jnp.abs(similarity) <= 1.0 + 1e-2))
    # bf16 matmuls + approx reciprocal => loose tolerance vs f32 reference
    assert bool(jnp.max(jnp.abs(similarity - reference)) < 5e-2), (similarity, reference)
    print("KERNEL_OK")
</pallas_src>

<mosaic_0001>
module attributes {stable_mosaic.version = 11 : i64} {
  func.func @dual_encoder_kernel(%arg0: i32, %arg1: memref<48x32xf32, #tpu.memory_space<vmem>>, %arg2: memref<4x128xf32, #tpu.memory_space<vmem>>, %arg3: memref<320x128xbf16, #tpu.memory_space<vmem>>, %arg4: memref<16x128xf32, #tpu.memory_space<vmem>>, %arg5: memref<2x128xf32, #tpu.memory_space<vmem>>) attributes {dimension_semantics = [#tpu.dimension_semantics<arbitrary>], iteration_bounds = array<i64: 1>, scalar_prefetch = 0 : i64, scratch_operands = 0 : i64, tpu.core_type = #tpu.core_type<tc>, window_params = [{pipeline_mode = #tpu.pipeline_mode<synchronous>, transform_indices = @transform_0, window_bounds = array<i64: 48, 32>}, {pipeline_mode = #tpu.pipeline_mode<synchronous>, transform_indices = @transform_1, window_bounds = array<i64: 4, 128>}, {pipeline_mode = #tpu.pipeline_mode<synchronous>, transform_indices = @transform_2, window_bounds = array<i64: 320, 128>}, {pipeline_mode = #tpu.pipeline_mode<synchronous>, transform_indices = @transform_3, window_bounds = array<i64: 16, 128>}, {pipeline_mode = #tpu.pipeline_mode<synchronous>, transform_indices = @transform_4, window_bounds = array<i64: 2, 128>}]} {
    %c0 = arith.constant 0 : index
    %c0_0 = arith.constant 0 : index
    %0 = vector.load %arg1[%c0, %c0_0] : memref<48x32xf32, #tpu.memory_space<vmem>>, vector<48x32xf32>
    %c0_1 = arith.constant 0 : index
    %c0_2 = arith.constant 0 : index
    %1 = vector.load %arg2[%c0_1, %c0_2] : memref<4x128xf32, #tpu.memory_space<vmem>>, vector<4x128xf32>
    %c0_3 = arith.constant 0 : index
    %c0_4 = arith.constant 0 : index
    %2 = vector.load %arg4[%c0_3, %c0_4] : memref<16x128xf32, #tpu.memory_space<vmem>>, vector<16x128xf32>
    %3 = tpu.iota {dimensions = array<i32: 0>} : vector<48x1xi32>
    %c16_i32 = arith.constant 16 : i32
    %4 = vector.broadcast %c16_i32 : i32 to vector<48x1xi32>
    %5 = arith.cmpi slt, %3, %4 : vector<48x1xi32>
    %cst = arith.constant 0.000000e+00 : f32
    %6 = vector.broadcast %cst : f32 to vector<48x32xf32>
    %7 = vector.shape_cast %5 : vector<48x1xi1> to vector<48x1xi1>
    %8 = vector.broadcast %7 : vector<48x1xi1> to vector<48x32xi1>
    %9 = arith.select %8, %0, %6 : vector<48x32xi1>, vector<48x32xf32>
    %10 = vector.shape_cast %5 : vector<48x1xi1> to vector<48x1xi1>
    %11 = vector.broadcast %10 : vector<48x1xi1> to vector<48x32xi1>
    %12 = arith.select %11, %6, %0 : vector<48x32xi1>, vector<48x32xf32>
    %13 = tpu.concatenate %9, %12 in 1 : vector<48x32xf32>, vector<48x32xf32> -> vector<48x64xf32>
    %14 = arith.truncf %13 : vector<48x64xf32> to vector<48x64xbf16>
    %c0_5 = arith.constant 0 : index
    %c0_6 = arith.constant 0 : index
    %15 = vector.load %arg3[%c0_5, %c0_6] : memref<320x128xbf16, #tpu.memory_space<vmem>>, vector<64x128xbf16>
    %cst_7 = arith.constant dense<0.000000e+00> : vector<48x128xf32>
    %16 = tpu.matmul %14, %15, %cst_7 {dimension_numbers = #tpu.dot_dimension_numbers<[1], [0], [0], [1], [0, 0, 1, 1], [], []>} : vector<48x64xbf16>, vector<64x128xbf16>, vector<48x128xf32> -> vector<48x128xf32>
    %17 = vector.extract_strided_slice %16 {offsets = [0, 0], sizes = [48, 96], strides = [1, 1]} : vector<48x128xf32> to vector<48x96xf32>
    %18 = vector.extract_strided_slice %2 {offsets = [0, 0], sizes = [1, 96], strides = [1, 1]} : vector<16x128xf32> to vector<1x96xf32>
    %19 = vector.extract_strided_slice %2 {offsets = [8, 0], sizes = [1, 96], strides = [1, 1]} : vector<16x128xf32> to vector<1x96xf32>
    %20 = vector.shape_cast %5 : vector<48x1xi1> to vector<48x1xi1>
    %21 = vector.broadcast %20 : vector<48x1xi1> to vector<48x96xi1>
    %22 = vector.shape_cast %18 : vector<1x96xf32> to vector<1x96xf32>
    %23 = vector.broadcast %22 : vector<1x96xf32> to vector<48x96xf32>
    %24 = vector.shape_cast %19 : vector<1x96xf32> to vector<1x96xf32>
    %25 = vector.broadcast %24 : vector<1x96xf32> to vector<48x96xf32>
    %26 = arith.select %21, %23, %25 : vector<48x96xi1>, vector<48x96xf32>
    %27 = arith.addf %17, %26 : vector<48x96xf32>
    %28 = vector.extract_strided_slice %27 {offsets = [0, 0], sizes = [48, 32], strides = [1, 1]} : vector<48x96xf32> to vector<48x32xf32>
    %29 = vector.extract_strided_slice %27 {offsets = [0, 32], sizes = [48, 32], strides = [1, 1]} : vector<48x96xf32> to vector<48x32xf32>
    %30 = vector.extract_strided_slice %27 {offsets = [0, 64], sizes = [48, 32], strides = [1, 1]} : vector<48x96xf32> to vector<48x32xf32>
    %31 = vector.extract_strided_slice %28 {offsets = [0, 0], sizes = [8, 32], strides = [1, 1]} : vector<48x32xf32> to vector<8x32xf32>
    %32 = arith.truncf %31 : vector<8x32xf32> to vector<8x32xbf16>
    %33 = vector.extract_strided_slice %29 {offsets = [0, 0], sizes = [8, 32], strides = [1, 1]} : vector<48x32xf32> to vector<8x32xf32>
    %34 = arith.truncf %33 : vector<8x32xf32> to vector<8x32xbf16>
    %35 = vector.extract_strided_slice %30 {offsets = [0, 0], sizes = [8, 32], strides = [1, 1]} : vector<48x32xf32> to vector<8x32xf32>
    %36 = arith.truncf %35 : vector<8x32xf32> to vector<8x32xbf16>
    %cst_8 = arith.constant dense<0.000000e+00> : vector<8x8xf32>
    %37 = tpu.matmul %32, %34, %cst_8 {dimension_numbers = #tpu.dot_dimension_numbers<[1], [1], [0], [0], [0, 0, 1, 0], [], []>} : vector<8x32xbf16>, vector<8x32xbf16>, vector<8x8xf32> -> vector<8x8xf32>
    %cst_9 = arith.constant 0.176776692 : f32
    %38 = vector.broadcast %cst_9 : f32 to vector<8x8xf32>
    %39 = arith.mulf %37, %38 : vector<8x8xf32>
    %40 = vector.extract_strided_slice %1 {offsets = [0, 0], sizes = [1, 8], strides = [1, 1]} : vector<4x128xf32> to vector<1x8xf32>
    %41 = vector.broadcast %40 : vector<1x8xf32> to vector<8x8xf32>
    %42 = arith.addf %39, %41 : vector<8x8xf32>
    %cst_10 = arith.constant dense<0xFF800000> : vector<8xf32>
    %43 = vector.multi_reduction <maximumf>, %42, %cst_10 [1] : vector<8x8xf32> to vector<8xf32>
    %44 = vector.shape_cast %43 : vector<8xf32> to vector<8x1xf32>
    %45 = vector.broadcast %44 : vector<8x1xf32> to vector<8x8xf32>
    %46 = arith.subf %42, %45 : vector<8x8xf32>
    %47 = math.exp %46 : vector<8x8xf32>
    %cst_11 = arith.constant dense<0.000000e+00> : vector<8xf32>
    %48 = vector.multi_reduction <add>, %47, %cst_11 [1] : vector<8x8xf32> to vector<8xf32>
    %49 = vector.shape_cast %48 : vector<8xf32> to vector<8x1xf32>
    %50 = tpu.reciprocal %49 {approx = true} : vector<8x1xf32> -> vector<8x1xf32>
    %51 = vector.broadcast %50 : vector<8x1xf32> to vector<8x8xf32>
    %52 = arith.mulf %47, %51 : vector<8x8xf32>
    %53 = arith.truncf %52 : vector<8x8xf32> to vector<8x8xbf16>
    %cst_12 = arith.constant dense<0.000000e+00> : vector<8x32xf32>
    %54 = tpu.matmul %53, %36, %cst_12 {dimension_numbers = #tpu.dot_dimension_numbers<[1], [0], [0], [1], [0, 0, 1, 1], [], []>} : vector<8x8xbf16>, vector<8x32xbf16>, vector<8x32xf32> -> vector<8x32xf32>
    %55 = vector.extract_strided_slice %28 {offsets = [8, 0], sizes = [8, 32], strides = [1, 1]} : vector<48x32xf32> to vector<8x32xf32>
    %56 = arith.truncf %55 : vector<8x32xf32> to vector<8x32xbf16>
    %57 = vector.extract_strided_slice %29 {offsets = [8, 0], sizes = [8, 32], strides = [1, 1]} : vector<48x32xf32> to vector<8x32xf32>
    %58 = arith.truncf %57 : vector<8x32xf32> to vector<8x32xbf16>
    %59 = vector.extract_strided_slice %30 {offsets = [8, 0], sizes = [8, 32], strides = [1, 1]} : vector<48x32xf32> to vector<8x32xf32>
    %60 = arith.truncf %59 : vector<8x32xf32> to vector<8x32xbf16>
    %cst_13 = arith.constant dense<0.000000e+00> : vector<8x8xf32>
    %61 = tpu.matmul %56, %58, %cst_13 {dimension_numbers = #tpu.dot_dimension_numbers<[1], [1], [0], [0], [0, 0, 1, 0], [], []>} : vector<8x32xbf16>, vector<8x32xbf16>, vector<8x8xf32> -> vector<8x8xf32>
    %cst_14 = arith.constant 0.176776692 : f32
    %62 = vector.broadcast %cst_14 : f32 to vector<8x8xf32>
    %63 = arith.mulf %61, %62 : vector<8x8xf32>
    %64 = vector.extract_strided_slice %1 {offsets = [1, 0], sizes = [1, 8], strides = [1, 1]} : vector<4x128xf32> to vector<1x8xf32>
    %65 = vector.broadcast %64 : vector<1x8xf32> to vector<8x8xf32>
    %66 = arith.addf %63, %65 : vector<8x8xf32>
    %cst_15 = arith.constant dense<0xFF800000> : vector<8xf32>
    %67 = vector.multi_reduction <maximumf>, %66, %cst_15 [1] : vector<8x8xf32> to vector<8xf32>
    %68 = vector.shape_cast %67 : vector<8xf32> to vector<8x1xf32>
    %69 = vector.broadcast %68 : vector<8x1xf32> to vector<8x8xf32>
    %70 = arith.subf %66, %69 : vector<8x8xf32>
    %71 = math.exp %70 : vector<8x8xf32>
    %cst_16 = arith.constant dense<0.000000e+00> : vector<8xf32>
    %72 = vector.multi_reduction <add>, %71, %cst_16 [1] : vector<8x8xf32> to vector<8xf32>
    %73 = vector.shape_cast %72 : vector<8xf32> to vector<8x1xf32>
    %74 = tpu.reciprocal %73 {approx = true} : vector<8x1xf32> -> vector<8x1xf32>
    %75 = vector.broadcast %74 : vector<8x1xf32> to vector<8x8xf32>
    %76 = arith.mulf %71, %75 : vector<8x8xf32>
    %77 = arith.truncf %76 : vector<8x8xf32> to vector<8x8xbf16>
    %cst_17 = arith.constant dense<0.000000e+00> : vector<8x32xf32>
    %78 = tpu.matmul %77, %60, %cst_17 {dimension_numbers = #tpu.dot_dimension_numbers<[1], [0], [0], [1], [0, 0, 1, 1], [], []>} : vector<8x8xbf16>, vector<8x32xbf16>, vector<8x32xf32> -> vector<8x32xf32>
    %79 = vector.extract_strided_slice %28 {offsets = [16, 0], sizes = [16, 32], strides = [1, 1]} : vector<48x32xf32> to vector<16x32xf32>
    %80 = arith.truncf %79 : vector<16x32xf32> to vector<16x32xbf16>
    %81 = vector.extract_strided_slice %29 {offsets = [16, 0], sizes = [16, 32], strides = [1, 1]} : vector<48x32xf32> to vector<16x32xf32>
    %82 = arith.truncf %81 : vector<16x32xf32> to vector<16x32xbf16>
    %83 = vector.extract_strided_slice %30 {offsets = [16, 0], sizes = [16, 32], strides = [1, 1]} : vector<48x32xf32> to vector<16x32xf32>
    %84 = arith.truncf %83 : vector<16x32xf32> to vector<16x32xbf16>
    %cst_18 = arith.constant dense<0.000000e+00> : vector<16x16xf32>
    %85 = tpu.matmul %80, %82, %cst_18 {dimension_numbers = #tpu.dot_dimension_numbers<[1], [1], [0], [0], [0, 0, 1, 0], [], []>} : vector<16x32xbf16>, vector<16x32xbf16>, vector<16x16xf32> -> vector<16x16xf32>
    %cst_19 = arith.constant 0.176776692 : f32
    %86 = vector.broadcast %cst_19 : f32 to vector<16x16xf32>
    %87 = arith.mulf %85, %86 : vector<16x16xf32>
    %88 = vector.extract_strided_slice %1 {offsets = [2, 0], sizes = [1, 16], strides = [1, 1]} : vector<4x128xf32> to vector<1x16xf32>
    %89 = vector.broadcast %88 : vector<1x16xf32> to vector<16x16xf32>
    %90 = arith.addf %87, %89 : vector<16x16xf32>
    %cst_20 = arith.constant dense<0xFF800000> : vector<16xf32>
    %91 = vector.multi_reduction <maximumf>, %90, %cst_20 [1] : vector<16x16xf32> to vector<16xf32>
    %92 = vector.shape_cast %91 : vector<16xf32> to vector<16x1xf32>
    %93 = vector.broadcast %92 : vector<16x1xf32> to vector<16x16xf32>
    %94 = arith.subf %90, %93 : vector<16x16xf32>
    %95 = math.exp %94 : vector<16x16xf32>
    %cst_21 = arith.constant dense<0.000000e+00> : vector<16xf32>
    %96 = vector.multi_reduction <add>, %95, %cst_21 [1] : vector<16x16xf32> to vector<16xf32>
    %97 = vector.shape_cast %96 : vector<16xf32> to vector<16x1xf32>
    %98 = tpu.reciprocal %97 {approx = true} : vector<16x1xf32> -> vector<16x1xf32>
    %99 = vector.broadcast %98 : vector<16x1xf32> to vector<16x16xf32>
    %100 = arith.mulf %95, %99 : vector<16x16xf32>
    %101 = arith.truncf %100 : vector<16x16xf32> to vector<16x16xbf16>
    %cst_22 = arith.constant dense<0.000000e+00> : vector<16x32xf32>
    %102 = tpu.matmul %101, %84, %cst_22 {dimension_numbers = #tpu.dot_dimension_numbers<[1], [0], [0], [1], [0, 0, 1, 1], [], []>} : vector<16x16xbf16>, vector<16x32xbf16>, vector<16x32xf32> -> vector<16x32xf32>
    %103 = vector.extract_strided_slice %28 {offsets = [32, 0], sizes = [16, 32], strides = [1, 1]} : vector<48x32xf32> to vector<16x32xf32>
    %104 = arith.truncf %103 : vector<16x32xf32> to vector<16x32xbf16>
    %105 = vector.extract_strided_slice %29 {offsets = [32, 0], sizes = [16, 32], strides = [1, 1]} : vector<48x32xf32> to vector<16x32xf32>
    %106 = arith.truncf %105 : vector<16x32xf32> to vector<16x32xbf16>
    %107 = vector.extract_strided_slice %30 {offsets = [32, 0], sizes = [16, 32], strides = [1, 1]} : vector<48x32xf32> to vector<16x32xf32>
    %108 = arith.truncf %107 : vector<16x32xf32> to vector<16x32xbf16>
    %cst_23 = arith.constant dense<0.000000e+00> : vector<16x16xf32>
    %109 = tpu.matmul %104, %106, %cst_23 {dimension_numbers = #tpu.dot_dimension_numbers<[1], [1], [0], [0], [0, 0, 1, 0], [], []>} : vector<16x32xbf16>, vector<16x32xbf16>, vector<16x16xf32> -> vector<16x16xf32>
    %cst_24 = arith.constant 0.176776692 : f32
    %110 = vector.broadcast %cst_24 : f32 to vector<16x16xf32>
    %111 = arith.mulf %109, %110 : vector<16x16xf32>
    %112 = vector.extract_strided_slice %1 {offsets = [3, 0], sizes = [1, 16], strides = [1, 1]} : vector<4x128xf32> to vector<1x16xf32>
    %113 = vector.broadcast %112 : vector<1x16xf32> to vector<16x16xf32>
    %114 = arith.addf %111, %113 : vector<16x16xf32>
    %cst_25 = arith.constant dense<0xFF800000> : vector<16xf32>
    %115 = vector.multi_reduction <maximumf>, %114, %cst_25 [1] : vector<16x16xf32> to vector<16xf32>
    %116 = vector.shape_cast %115 : vector<16xf32> to vector<16x1xf32>
    %117 = vector.broadcast %116 : vector<16x1xf32> to vector<16x16xf32>
    %118 = arith.subf %114, %117 : vector<16x16xf32>
    %119 = math.exp %118 : vector<16x16xf32>
    %cst_26 = arith.constant dense<0.000000e+00> : vector<16xf32>
    %120 = vector.multi_reduction <add>, %119, %cst_26 [1] : vector<16x16xf32> to vector<16xf32>
    %121 = vector.shape_cast %120 : vector<16xf32> to vector<16x1xf32>
    %122 = tpu.reciprocal %121 {approx = true} : vector<16x1xf32> -> vector<16x1xf32>
    %123 = vector.broadcast %122 : vector<16x1xf32> to vector<16x16xf32>
    %124 = arith.mulf %119, %123 : vector<16x16xf32>
    %125 = arith.truncf %124 : vector<16x16xf32> to vector<16x16xbf16>
    %cst_27 = arith.constant dense<0.000000e+00> : vector<16x32xf32>
    %126 = tpu.matmul %125, %108, %cst_27 {dimension_numbers = #tpu.dot_dimension_numbers<[1], [0], [0], [1], [0, 0, 1, 1], [], []>} : vector<16x16xbf16>, vector<16x32xbf16>, vector<16x32xf32> -> vector<16x32xf32>
    %127 = tpu.concatenate %54, %78, %102, %126 in 0 : vector<8x32xf32>, vector<8x32xf32>, vector<16x32xf32>, vector<16x32xf32> -> vector<48x32xf32>
    %cst_28 = arith.constant 0.000000e+00 : f32
    %128 = vector.broadcast %cst_28 : f32 to vector<48x32xf32>
    %129 = vector.shape_cast %5 : vector<48x1xi1> to vector<48x1xi1>
    %130 = vector.broadcast %129 : vector<48x1xi1> to vector<48x32xi1>
    %131 = arith.select %130, %127, %128 : vector<48x32xi1>, vector<48x32xf32>
    %132 = vector.shape_cast %5 : vector<48x1xi1> to vector<48x1xi1>
    %133 = vector.broadcast %132 : vector<48x1xi1> to vector<48x32xi1>
    %134 = arith.select %133, %128, %127 : vector<48x32xi1>, vector<48x32xf32>
    %135 = tpu.concatenate %131, %134 in 1 : vector<48x32xf32>, vector<48x32xf32> -> vector<48x64xf32>
    %136 = arith.truncf %135 : vector<48x64xf32> to vector<48x64xbf16>
    %c64 = arith.constant 64 : index
    %c0_29 = arith.constant 0 : index
    %137 = vector.load %arg3[%c64, %c0_29] : memref<320x128xbf16, #tpu.memory_space<vmem>>, vector<64x128xbf16>
    %cst_30 = arith.constant dense<0.000000e+00> : vector<48x128xf32>
    %138 = tpu.matmul %136, %137, %cst_30 {dimension_numbers = #tpu.dot_dimension_numbers<[1], [0], [0], [1], [0, 0, 1, 1], [], []>} : vector<48x64xbf16>, vector<64x128xbf16>, vector<48x128xf32> -> vector<48x128xf32>
    %139 = vector.extract_strided_slice %138 {offsets = [0, 0], sizes = [48, 32], strides = [1, 1]} : vector<48x128xf32> to vector<48x32xf32>
    %140 = vector.extract_strided_slice %2 {offsets = [1, 0], sizes = [1, 32], strides = [1, 1]} : vector<16x128xf32> to vector<1x32xf32>
    %141 = vector.extract_strided_slice %2 {offsets = [9, 0], sizes = [1, 32], strides = [1, 1]} : vector<16x128xf32> to vector<1x32xf32>
    %142 = vector.shape_cast %5 : vector<48x1xi1> to vector<48x1xi1>
    %143 = vector.broadcast %142 : vector<48x1xi1> to vector<48x32xi1>
    %144 = vector.shape_cast %140 : vector<1x32xf32> to vector<1x32xf32>
    %145 = vector.broadcast %144 : vector<1x32xf32> to vector<48x32xf32>
    %146 = vector.shape_cast %141 : vector<1x32xf32> to vector<1x32xf32>
    %147 = vector.broadcast %146 : vector<1x32xf32> to vector<48x32xf32>
    %148 = arith.select %143, %145, %147 : vector<48x32xi1>, vector<48x32xf32>
    %149 = arith.addf %139, %148 : vector<48x32xf32>
    %150 = arith.addf %0, %149 : vector<48x32xf32>
    %151 = vector.extract_strided_slice %2 {offsets = [4, 0], sizes = [1, 32], strides = [1, 1]} : vector<16x128xf32> to vector<1x32xf32>
    %152 = vector.extract_strided_slice %2 {offsets = [12, 0], sizes = [1, 32], strides = [1, 1]} : vector<16x128xf32> to vector<1x32xf32>
    %153 = vector.shape_cast %5 : vector<48x1xi1> to vector<48x1xi1>
    %154 = vector.broadcast %153 : vector<48x1xi1> to vector<48x32xi1>
    %155 = vector.shape_cast %151 : vector<1x32xf32> to vector<1x32xf32>
    %156 = vector.broadcast %155 : vector<1x32xf32> to vector<48x32xf32>
    %157 = vector.shape_cast %152 : vector<1x32xf32> to vector<1x32xf32>
    %158 = vector.broadcast %157 : vector<1x32xf32> to vector<48x32xf32>
    %159 = arith.select %154, %156, %158 : vector<48x32xi1>, vector<48x32xf32>
    %160 = vector.extract_strided_slice %2 {offsets = [5, 0], sizes = [1, 32], strides = [1, 1]} : vector<16x128xf32> to vector<1x32xf32>
    %161 = vector.extract_strided_slice %2 {offsets = [13, 0], sizes = [1, 32], strides = [1, 1]} : vector<16x128xf32> to vector<1x32xf32>
    %162 = vector.shape_cast %5 : vector<48x1xi1> to vector<48x1xi1>
    %163 = vector.broadcast %162 : vector<48x1xi1> to vector<48x32xi1>
    %164 = vector.shape_cast %160 : vector<1x32xf32> to vector<1x32xf32>
    %165 = vector.broadcast %164 : vector<1x32xf32> to vector<48x32xf32>
    %166 = vector.shape_cast %161 : vector<1x32xf32> to vector<1x32xf32>
    %167 = vector.broadcast %166 : vector<1x32xf32> to vector<48x32xf32>
    %168 = arith.select %163, %165, %167 : vector<48x32xi1>, vector<48x32xf32>
    %cst_31 = arith.constant dense<0.000000e+00> : vector<48xf32>
    %169 = vector.multi_reduction <add>, %150, %cst_31 [1] : vector<48x32xf32> to vector<48xf32>
    %170 = vector.shape_cast %169 : vector<48xf32> to vector<48x1xf32>
    %cst_32 = arith.constant 3.200000e+01 : f32
    %171 = vector.broadcast %cst_32 : f32 to vector<48x1xf32>
    %172 = arith.divf %170, %171 : vector<48x1xf32>
    %173 = vector.broadcast %172 : vector<48x1xf32> to vector<48x32xf32>
    %174 = arith.subf %150, %173 : vector<48x32xf32>
    %175 = arith.mulf %174, %174 : vector<48x32xf32>
    %cst_33 = arith.constant dense<0.000000e+00> : vector<48xf32>
    %176 = vector.multi_reduction <add>, %175, %cst_33 [1] : vector<48x32xf32> to vector<48xf32>
    %177 = vector.shape_cast %176 : vector<48xf32> to vector<48x1xf32>
    %cst_34 = arith.constant 3.200000e+01 : f32
    %178 = vector.broadcast %cst_34 : f32 to vector<48x1xf32>
    %179 = arith.divf %177, %178 : vector<48x1xf32>
    %180 = vector.broadcast %172 : vector<48x1xf32> to vector<48x32xf32>
    %181 = arith.subf %150, %180 : vector<48x32xf32>
    %cst_35 = arith.constant 9.99999974E-6 : f32
    %182 = vector.broadcast %cst_35 : f32 to vector<48x1xf32>
    %183 = arith.addf %179, %182 : vector<48x1xf32>
    %184 = math.rsqrt %183 : vector<48x1xf32>
    %185 = vector.broadcast %184 : vector<48x1xf32> to vector<48x32xf32>
    %186 = arith.mulf %181, %185 : vector<48x32xf32>
    %187 = arith.mulf %186, %159 : vector<48x32xf32>
    %188 = arith.addf %187, %168 : vector<48x32xf32>
    %cst_36 = arith.constant 0.000000e+00 : f32
    %189 = vector.broadcast %cst_36 : f32 to vector<48x32xf32>
    %190 = vector.shape_cast %5 : vector<48x1xi1> to vector<48x1xi1>
    %191 = vector.broadcast %190 : vector<48x1xi1> to vector<48x32xi1>
    %192 = arith.select %191, %188, %189 : vector<48x32xi1>, vector<48x32xf32>
    %193 = vector.shape_cast %5 : vector<48x1xi1> to vector<48x1xi1>
    %194 = vector.broadcast %193 : vector<48x1xi1> to vector<48x32xi1>
    %195 = arith.select %194, %189, %188 : vector<48x32xi1>, vector<48x32xf32>
    %196 = tpu.concatenate %192, %195 in 1 : vector<48x32xf32>, vector<48x32xf32> -> vector<48x64xf32>
    %197 = arith.truncf %196 : vector<48x64xf32> to vector<48x64xbf16>
    %c128 = arith.constant 128 : index
    %c0_37 = arith.constant 0 : index
    %198 = vector.load %arg3[%c128, %c0_37] : memref<320x128xbf16, #tpu.memory_space<vmem>>, vector<64x128xbf16>
    %cst_38 = arith.constant dense<0.000000e+00> : vector<48x128xf32>
    %199 = tpu.matmul %197, %198, %cst_38 {dimension_numbers = #tpu.dot_dimension_numbers<[1], [0], [0], [1], [0, 0, 1, 1], [], []>} : vector<48x64xbf16>, vector<64x128xbf16>, vector<48x128xf32> -> vector<48x128xf32>
    %200 = vector.extract_strided_slice %199 {offsets = [0, 0], sizes = [48, 64], strides = [1, 1]} : vector<48x128xf32> to vector<48x64xf32>
    %201 = vector.extract_strided_slice %2 {offsets = [2, 0], sizes = [1, 64], strides = [1, 1]} : vector<16x128xf32> to vector<1x64xf32>
    %202 = vector.extract_strided_slice %2 {offsets = [10, 0], sizes = [1, 64], strides = [1, 1]} : vector<16x128xf32> to vector<1x64xf32>
    %203 = vector.shape_cast %5 : vector<48x1xi1> to vector<48x1xi1>
    %204 = vector.broadcast %203 : vector<48x1xi1> to vector<48x64xi1>
    %205 = vector.shape_cast %201 : vector<1x64xf32> to vector<1x64xf32>
    %206 = vector.broadcast %205 : vector<1x64xf32> to vector<48x64xf32>
    %207 = vector.shape_cast %202 : vector<1x64xf32> to vector<1x64xf32>
    %208 = vector.broadcast %207 : vector<1x64xf32> to vector<48x64xf32>
    %209 = arith.select %204, %206, %208 : vector<48x64xi1>, vector<48x64xf32>
    %210 = arith.addf %200, %209 : vector<48x64xf32>
    %211 = arith.mulf %210, %210 : vector<48x64xf32>
    %212 = arith.mulf %210, %211 : vector<48x64xf32>
    %cst_39 = arith.constant 4.471500e-02 : f32
    %213 = vector.broadcast %cst_39 : f32 to vector<48x64xf32>
    %214 = arith.mulf %213, %212 : vector<48x64xf32>
    %215 = arith.addf %210, %214 : vector<48x64xf32>
    %cst_40 = arith.constant 0.797884583 : f32
    %216 = vector.broadcast %cst_40 : f32 to vector<48x64xf32>
    %217 = arith.mulf %216, %215 : vector<48x64xf32>
    %218 = math.tanh %217 : vector<48x64xf32>
    %cst_41 = arith.constant 1.000000e+00 : f32
    %219 = vector.broadcast %cst_41 : f32 to vector<48x64xf32>
    %220 = arith.addf %219, %218 : vector<48x64xf32>
    %cst_42 = arith.constant 5.000000e-01 : f32
    %221 = vector.broadcast %cst_42 : f32 to vector<48x64xf32>
    %222 = arith.mulf %221, %220 : vector<48x64xf32>
    %223 = arith.mulf %210, %222 : vector<48x64xf32>
    %cst_43 = arith.constant 0.000000e+00 : f32
    %224 = vector.broadcast %cst_43 : f32 to vector<48x64xf32>
    %225 = vector.shape_cast %5 : vector<48x1xi1> to vector<48x1xi1>
    %226 = vector.broadcast %225 : vector<48x1xi1> to vector<48x64xi1>
    %227 = arith.select %226, %223, %224 : vector<48x64xi1>, vector<48x64xf32>
    %228 = vector.shape_cast %5 : vector<48x1xi1> to vector<48x1xi1>
    %229 = vector.broadcast %228 : vector<48x1xi1> to vector<48x64xi1>
    %230 = arith.select %229, %224, %223 : vector<48x64xi1>, vector<48x64xf32>
    %231 = tpu.concatenate %227, %230 in 1 : vector<48x64xf32>, vector<48x64xf32> -> vector<48x128xf32>
    %232 = arith.truncf %231 : vector<48x128xf32> to vector<48x128xbf16>
    %c192 = arith.constant 192 : index
    %c0_44 = arith.constant 0 : index
    %233 = vector.load %arg3[%c192, %c0_44] : memref<320x128xbf16, #tpu.memory_space<vmem>>, vector<128x128xbf16>
    %cst_45 = arith.constant dense<0.000000e+00> : vector<48x128xf32>
    %234 = tpu.matmul %232, %233, %cst_45 {dimension_numbers = #tpu.dot_dimension_numbers<[1], [0], [0], [1], [0, 0, 1, 1], [], []>} : vector<48x128xbf16>, vector<128x128xbf16>, vector<48x128xf32> -> vector<48x128xf32>
    %235 = vector.extract_strided_slice %234 {offsets = [0, 0], sizes = [48, 32], strides = [1, 1]} : vector<48x128xf32> to vector<48x32xf32>
    %236 = vector.extract_strided_slice %2 {offsets = [3, 0], sizes = [1, 32], strides = [1, 1]} : vector<16x128xf32> to vector<1x32xf32>
    %237 = vector.extract_strided_slice %2 {offsets = [11, 0], sizes = [1, 32], strides = [1, 1]} : vector<16x128xf32> to vector<1x32xf32>
    %238 = vector.shape_cast %5 : vector<48x1xi1> to vector<48x1xi1>
    %239 = vector.broadcast %238 : vector<48x1xi1> to vector<48x32xi1>
    %240 = vector.shape_cast %236 : vector<1x32xf32> to vector<1x32xf32>
    %241 = vector.broadcast %240 : vector<1x32xf32> to vector<48x32xf32>
    %242 = vector.shape_cast %237 : vector<1x32xf32> to vector<1x32xf32>
    %243 = vector.broadcast %242 : vector<1x32xf32> to vector<48x32xf32>
    %244 = arith.select %239, %241, %243 : vector<48x32xi1>, vector<48x32xf32>
    %245 = arith.addf %235, %244 : vector<48x32xf32>
    %246 = arith.addf %188, %245 : vector<48x32xf32>
    %247 = vector.extract_strided_slice %2 {offsets = [6, 0], sizes = [1, 32], strides = [1, 1]} : vector<16x128xf32> to vector<1x32xf32>
    %248 = vector.extract_strided_slice %2 {offsets = [14, 0], sizes = [1, 32], strides = [1, 1]} : vector<16x128xf32> to vector<1x32xf32>
    %249 = vector.shape_cast %5 : vector<48x1xi1> to vector<48x1xi1>
    %250 = vector.broadcast %249 : vector<48x1xi1> to vector<48x32xi1>
    %251 = vector.shape_cast %247 : vector<1x32xf32> to vector<1x32xf32>
    %252 = vector.broadcast %251 : vector<1x32xf32> to vector<48x32xf32>
    %253 = vector.shape_cast %248 : vector<1x32xf32> to vector<1x32xf32>
    %254 = vector.broadcast %253 : vector<1x32xf32> to vector<48x32xf32>
    %255 = arith.select %250, %252, %254 : vector<48x32xi1>, vector<48x32xf32>
    %256 = vector.extract_strided_slice %2 {offsets = [7, 0], sizes = [1, 32], strides = [1, 1]} : vector<16x128xf32> to vector<1x32xf32>
    %257 = vector.extract_strided_slice %2 {offsets = [15, 0], sizes = [1, 32], strides = [1, 1]} : vector<16x128xf32> to vector<1x32xf32>
    %258 = vector.shape_cast %5 : vector<48x1xi1> to vector<48x1xi1>
    %259 = vector.broadcast %258 : vector<48x1xi1> to vector<48x32xi1>
    %260 = vector.shape_cast %256 : vector<1x32xf32> to vector<1x32xf32>
    %261 = vector.broadcast %260 : vector<1x32xf32> to vector<48x32xf32>
    %262 = vector.shape_cast %257 : vector<1x32xf32> to vector<1x32xf32>
    %263 = vector.broadcast %262 : vector<1x32xf32> to vector<48x32xf32>
    %264 = arith.select %259, %261, %263 : vector<48x32xi1>, vector<48x32xf32>
    %cst_46 = arith.constant dense<0.000000e+00> : vector<48xf32>
    %265 = vector.multi_reduction <add>, %246, %cst_46 [1] : vector<48x32xf32> to vector<48xf32>
    %266 = vector.shape_cast %265 : vector<48xf32> to vector<48x1xf32>
    %cst_47 = arith.constant 3.200000e+01 : f32
    %267 = vector.broadcast %cst_47 : f32 to vector<48x1xf32>
    %268 = arith.divf %266, %267 : vector<48x1xf32>
    %269 = vector.broadcast %268 : vector<48x1xf32> to vector<48x32xf32>
    %270 = arith.subf %246, %269 : vector<48x32xf32>
    %271 = arith.mulf %270, %270 : vector<48x32xf32>
    %cst_48 = arith.constant dense<0.000000e+00> : vector<48xf32>
    %272 = vector.multi_reduction <add>, %271, %cst_48 [1] : vector<48x32xf32> to vector<48xf32>
    %273 = vector.shape_cast %272 : vector<48xf32> to vector<48x1xf32>
    %cst_49 = arith.constant 3.200000e+01 : f32
    %274 = vector.broadcast %cst_49 : f32 to vector<48x1xf32>
    %275 = arith.divf %273, %274 : vector<48x1xf32>
    %276 = vector.broadcast %268 : vector<48x1xf32> to vector<48x32xf32>
    %277 = arith.subf %246, %276 : vector<48x32xf32>
    %cst_50 = arith.constant 9.99999974E-6 : f32
    %278 = vector.broadcast %cst_50 : f32 to vector<48x1xf32>
    %279 = arith.addf %275, %278 : vector<48x1xf32>
    %280 = math.rsqrt %279 : vector<48x1xf32>
    %281 = vector.broadcast %280 : vector<48x1xf32> to vector<48x32xf32>
    %282 = arith.mulf %277, %281 : vector<48x32xf32>
    %283 = arith.mulf %282, %255 : vector<48x32xf32>
    %284 = arith.addf %283, %264 : vector<48x32xf32>
    %285 = vector.extract_strided_slice %284 {offsets = [0, 0], sizes = [8, 32], strides = [1, 1]} : vector<48x32xf32> to vector<8x32xf32>
    %cst_51 = arith.constant dense<0.000000e+00> : vector<32xf32>
    %286 = vector.multi_reduction <add>, %285, %cst_51 [0] : vector<8x32xf32> to vector<32xf32>
    %287 = vector.shape_cast %286 : vector<32xf32> to vector<1x32xf32>
    %cst_52 = arith.constant 8.000000e+00 : f32
    %288 = vector.broadcast %cst_52 : f32 to vector<1x32xf32>
    %289 = arith.divf %287, %288 : vector<1x32xf32>
    %290 = vector.extract_strided_slice %284 {offsets = [16, 0], sizes = [16, 32], strides = [1, 1]} : vector<48x32xf32> to vector<16x32xf32>
    %cst_53 = arith.constant dense<0.000000e+00> : vector<32xf32>
    %291 = vector.multi_reduction <add>, %290, %cst_53 [0] : vector<16x32xf32> to vector<32xf32>
    %292 = vector.shape_cast %291 : vector<32xf32> to vector<1x32xf32>
    %cst_54 = arith.constant 1.600000e+01 : f32
    %293 = vector.broadcast %cst_54 : f32 to vector<1x32xf32>
    %294 = arith.divf %292, %293 : vector<1x32xf32>
    %295 = arith.mulf %289, %294 : vector<1x32xf32>
    %cst_55 = arith.constant dense<0.000000e+00> : vector<1xf32>
    %296 = vector.multi_reduction <add>, %295, %cst_55 [1] : vector<1x32xf32> to vector<1xf32>
    %297 = vector.shape_cast %296 : vector<1xf32> to vector<1x1xf32>
    %298 = arith.mulf %289, %289 : vector<1x32xf32>
    %cst_56 = arith.constant dense<0.000000e+00> : vector<1xf32>
    %299 = vector.multi_reduction <add>, %298, %cst_56 [1] : vector<1x32xf32> to vector<1xf32>
    %300 = vector.shape_cast %299 : vector<1xf32> to vector<1x1xf32>
    %301 = math.sqrt %300 : vector<1x1xf32>
    %302 = arith.mulf %294, %294 : vector<1x32xf32>
    %cst_57 = arith.constant dense<0.000000e+00> : vector<1xf32>
    %303 = vector.multi_reduction <add>, %302, %cst_57 [1] : vector<1x32xf32> to vector<1xf32>
    %304 = vector.shape_cast %303 : vector<1xf32> to vector<1x1xf32>
    %305 = math.sqrt %304 : vector<1x1xf32>
    %306 = arith.mulf %301, %305 : vector<1x1xf32>
    %cst_58 = arith.constant 9.99999993E-9 : f32
    %307 = vector.broadcast %cst_58 : f32 to vector<1x1xf32>
    %308 = arith.maximumf %306, %307 : vector<1x1xf32>
    %309 = tpu.reciprocal %308 {approx = true} : vector<1x1xf32> -> vector<1x1xf32>
    %310 = arith.mulf %297, %309 : vector<1x1xf32>
    %311 = vector.shape_cast %310 : vector<1x1xf32> to vector<1x1xf32>
    %312 = vector.broadcast %311 : vector<1x1xf32> to vector<1x128xf32>
    %313 = vector.extract_strided_slice %284 {offsets = [8, 0], sizes = [8, 32], strides = [1, 1]} : vector<48x32xf32> to vector<8x32xf32>
    %cst_59 = arith.constant dense<0.000000e+00> : vector<32xf32>
    %314 = vector.multi_reduction <add>, %313, %cst_59 [0] : vector<8x32xf32> to vector<32xf32>
    %315 = vector.shape_cast %314 : vector<32xf32> to vector<1x32xf32>
    %cst_60 = arith.constant 8.000000e+00 : f32
    %316 = vector.broadcast %cst_60 : f32 to vector<1x32xf32>
    %317 = arith.divf %315, %316 : vector<1x32xf32>
    %318 = vector.extract_strided_slice %284 {offsets = [32, 0], sizes = [16, 32], strides = [1, 1]} : vector<48x32xf32> to vector<16x32xf32>
    %cst_61 = arith.constant dense<0.000000e+00> : vector<32xf32>
    %319 = vector.multi_reduction <add>, %318, %cst_61 [0] : vector<16x32xf32> to vector<32xf32>
    %320 = vector.shape_cast %319 : vector<32xf32> to vector<1x32xf32>
    %cst_62 = arith.constant 1.600000e+01 : f32
    %321 = vector.broadcast %cst_62 : f32 to vector<1x32xf32>
    %322 = arith.divf %320, %321 : vector<1x32xf32>
    %323 = arith.mulf %317, %322 : vector<1x32xf32>
    %cst_63 = arith.constant dense<0.000000e+00> : vector<1xf32>
    %324 = vector.multi_reduction <add>, %323, %cst_63 [1] : vector<1x32xf32> to vector<1xf32>
    %325 = vector.shape_cast %324 : vector<1xf32> to vector<1x1xf32>
    %326 = arith.mulf %317, %317 : vector<1x32xf32>
    %cst_64 = arith.constant dense<0.000000e+00> : vector<1xf32>
    %327 = vector.multi_reduction <add>, %326, %cst_64 [1] : vector<1x32xf32> to vector<1xf32>
    %328 = vector.shape_cast %327 : vector<1xf32> to vector<1x1xf32>
    %329 = math.sqrt %328 : vector<1x1xf32>
    %330 = arith.mulf %322, %322 : vector<1x32xf32>
    %cst_65 = arith.constant dense<0.000000e+00> : vector<1xf32>
    %331 = vector.multi_reduction <add>, %330, %cst_65 [1] : vector<1x32xf32> to vector<1xf32>
    %332 = vector.shape_cast %331 : vector<1xf32> to vector<1x1xf32>
    %333 = math.sqrt %332 : vector<1x1xf32>
    %334 = arith.mulf %329, %333 : vector<1x1xf32>
    %cst_66 = arith.constant 9.99999993E-9 : f32
    %335 = vector.broadcast %cst_66 : f32 to vector<1x1xf32>
    %336 = arith.maximumf %334, %335 : vector<1x1xf32>
    %337 = tpu.reciprocal %336 {approx = true} : vector<1x1xf32> -> vector<1x1xf32>
    %338 = arith.mulf %325, %337 : vector<1x1xf32>
    %339 = vector.shape_cast %338 : vector<1x1xf32> to vector<1x1xf32>
    %340 = vector.broadcast %339 : vector<1x1xf32> to vector<1x128xf32>
    %341 = tpu.concatenate %312, %340 in 0 : vector<1x128xf32>, vector<1x128xf32> -> vector<2x128xf32>
    %c0_67 = arith.constant 0 : index
    %c0_68 = arith.constant 0 : index
    %342 = vector.load %arg5[%c0_67, %c0_68] : memref<2x128xf32, #tpu.memory_space<vmem>>, vector<2x128xf32>
    tpu.vector_store %arg5[%c0_67, %c0_68], %341 {strides = array<i32>} : memref<2x128xf32, #tpu.memory_space<vmem>>, vector<2x128xf32>,
    return
  }
  func.func @transform_0(%arg0: i32) -> (i32, i32) {
    %c0_i32 = arith.constant 0 : i32
    %c0_i32_0 = arith.constant 0 : i32
    %c0_i32_1 = arith.constant 0 : i32
    return %c0_i32, %c0_i32_0 : i32, i32
  }
  func.func @transform_1(%arg0: i32) -> (i32, i32) {
    %c0_i32 = arith.constant 0 : i32
    %c0_i32_0 = arith.constant 0 : i32
    %c0_i32_1 = arith.constant 0 : i32
    return %c0_i32, %c0_i32_0 : i32, i32
  }
  func.func @transform_2(%arg0: i32) -> (i32, i32) {
    %c0_i32 = arith.constant 0 : i32
    %c0_i32_0 = arith.constant 0 : i32
    %c0_i32_1 = arith.constant 0 : i32
    return %c0_i32, %c0_i32_0 : i32, i32
  }
  func.func @transform_3(%arg0: i32) -> (i32, i32) {
    %c0_i32 = arith.constant 0 : i32
    %c0_i32_0 = arith.constant 0 : i32
    %c0_i32_1 = arith.constant 0 : i32
    return %c0_i32, %c0_i32_0 : i32, i32
  }
  func.func @transform_4(%arg0: i32) -> (i32, i32) {
    %c0_i32 = arith.constant 0 : i32
    %c0_i32_0 = arith.constant 0 : i32
    %c0_i32_1 = arith.constant 0 : i32
    return %c0_i32, %c0_i32_0 : i32, i32
  }
}

</mosaic_0001>

<llo_original>
// kernel: tpu_custom_call.1
$region0: #{tpu_custom_call.1}
  #allocation0 [shape = 'u32[]', space=smem, size = 0x4, offset = 0x4, fixed_abs, tag = 'smem constant byte address 0x4 - core index']
  #allocation1 [shape = 'u32[144,128]{1,0:T(1,128)}', space=vmem, size = 0x12000, scoped, tag = 'internal scratch']
  %s0 = inlined_call_operand.vmem [shape: f32[48,32], index: 0, kind: input, shape index: {}]
  %s1 = inlined_call_operand.vmem [shape: f32[4,128], index: 1, kind: input, shape index: {}]
  %s2 = inlined_call_operand.hbm [shape: bf16[320,128], index: 2, kind: input, shape index: {}]
  %s3 = inlined_call_operand.vmem [shape: f32[16,128], index: 3, kind: input, shape index: {}]
  %s4 = inlined_call_operand.hbm [shape: f32[2,128], index: 4, kind: output, shape index: {}]
  %s5 = sld [smem:[#allocation0]]
  $region30: #{tpu_custom_call.1} parent=0
    _
  %s7 = ssub.s32 1, %s5
  %s8 = scalar_select 0, %s7, %s5
  $region1: #{tpu_custom_call.1} parent=0
    #allocation2 [shape = 'u8[81920]{0}', space=vmem, size = 0x14000, scoped, tag = 'input window, operand 2, single buffered']
    #allocation3 [shape = 's32[1]{0}', space=sflag, size = 0x4, scoped, tag = 'scoped memory for tpu_custom_call.1']
    #allocation4 [shape = 's32[1]{0}', space=sflag, size = 0x4, scoped, tag = 'scoped memory for tpu_custom_call.1']
    #allocation5 [shape = 'u8[1024]{0}', space=vmem, size = 0x400, scoped, tag = 'output window, operand 0, single buffered']
    %9 = vsyncpa [#allocation3], 0
    %10 = vsyncpa [#allocation4], 0
    // Predicated region
    $region2: #{tpu_custom_call.1} parent=1 // pred_check
      _
    $region3: #{tpu_custom_call.1} parent=1 // pred_check_branch
      %12 = sbr.rel (0) target = $region5
    $region4: #{tpu_custom_call.1} parent=1 // pred_region
      _
    $region5: #{tpu_custom_call.1} parent=1 // pred_fallthru
      _
    // Predicated region
    $region6: #{tpu_custom_call.1} parent=1 // pred_check
      _
    $region7: #{tpu_custom_call.1} parent=1 // pred_check_branch
      %14 = sbr.rel (0) target = $region9
    $region8: #{tpu_custom_call.1} parent=1 // pred_region
      _
    $region9: #{tpu_custom_call.1} parent=1 // pred_fallthru
      _
    // Predicated region
    $region10: #{tpu_custom_call.1} parent=1 // pred_check
      _
    $region11: #{tpu_custom_call.1} parent=1 // pred_check_branch
      %16 = sbr.rel (0) target = $region13
    $region12: #{tpu_custom_call.1} parent=1 // pred_region
      %s18 = ssub.s32 2560, 2560
      %19 = vsyncadd [#allocation3], %s18
      %s20 = sshll.u32 [#allocation2], 4
      %s21 = int_to_ptr.vmem [resolvable:$true] %s20
      %26 = dma.hbm_to_vmem [thread:$0]  %s2, 2560, %s21, [#allocation3], 64, 64, 4
    $region13: #{tpu_custom_call.1} parent=1 // pred_fallthru
      _
    // Predicated region
    $region14: #{tpu_custom_call.1} parent=1 // pred_check
      _
    $region15: #{tpu_custom_call.1} parent=1 // pred_check_branch
      %28 = sbr.rel (0) target = $region17
    $region16: #{tpu_custom_call.1} parent=1 // pred_region
      _
    $region17: #{tpu_custom_call.1} parent=1 // pred_fallthru
      _
    // Predicated region
    $region18: #{tpu_custom_call.1} parent=1 // pred_check
      _
    $region19: #{tpu_custom_call.1} parent=1 // pred_check_branch
      %30 = sbr.rel (0) target = $region21
    $region20: #{tpu_custom_call.1} parent=1 // pred_region
      %31 = dma.done [#allocation3], 2560
    $region21: #{tpu_custom_call.1} parent=1 // pred_fallthru
      _
    %v33 = vld [vmem:[%s0] sm:$0xff]
    %v34 = vld [vmem:[%s0 + $0x8] sm:$0xff]
    %v35 = vld [vmem:[%s0 + $0x10] sm:$0xff]
    %v36 = vld [vmem:[%s0 + $0x18] sm:$0xff]
    %v37 = vld [vmem:[%s0 + $0x20] sm:$0xff]
    %v38 = vld [vmem:[%s0 + $0x28] sm:$0xff]
    %v39 = vld [vmem:[%s1] sm:$0xf]
    %v40 = vld [vmem:[%s3] sm:$0xff]
    %v41 = vld [vmem:[%s3 + $0x8] sm:$0xff]
    %v42 = vlaneseq
    %v43 = vshrl.u32 %v42, 7
    %v44 = vadd.s32 %v43, 8
    %v45 = vadd.s32 %v43, 16
    %v46 = vadd.s32 %v43, 24
    %v47 = vadd.s32 %v43, 32
    %v48 = vadd.s32 %v43, 40
    %vm49 = vcmp.lt.s32.totalorder %v43, 16
    %vm50 = vcmp.lt.s32.totalorder %v44, 16
    %vm51 = vcmp.lt.s32.totalorder %v45, 16
    %vm52 = vcmp.lt.s32.totalorder %v46, 16
    %vm53 = vcmp.lt.s32.totalorder %v47, 16
    %vm54 = vcmp.lt.s32.totalorder %v48, 16
    %v55 = vsel %vm49, 1, 0
    %v56 = vsel %vm50, 1, 0
    %v57 = vsel %vm51, 1, 0
    %v58 = vsel %vm52, 1, 0
    %v59 = vsel %vm53, 1, 0
    %v60 = vsel %vm54, 1, 0
    %vm61 = vcmp.eq.s32.totalorder %v55, 1
    %vm62 = vcmp.eq.s32.totalorder %v56, 1
    %vm63 = vcmp.eq.s32.totalorder %v57, 1
    %vm64 = vcmp.eq.s32.totalorder %v58, 1
    %vm65 = vcmp.eq.s32.totalorder %v59, 1
    %vm66 = vcmp.eq.s32.totalorder %v60, 1
    %v67 = vsel %vm61, %v33, 0.0
    %v68 = vsel %vm62, %v34, 0.0
    %v69 = vsel %vm63, %v35, 0.0
    %v70 = vsel %vm64, %v36, 0.0
    %v71 = vsel %vm65, %v37, 0.0
    %v72 = vsel %vm66, %v38, 0.0
    %v73 = vsel %vm61, 0.0, %v33
    %v74 = vsel %vm62, 0.0, %v34
    %v75 = vsel %vm63, 0.0, %v35
    %v76 = vsel %vm64, 0.0, %v36
    %v77 = vsel %vm65, 0.0, %v37
    %v78 = vsel %vm66, 0.0, %v38
    %85 = vrot.lane.b32.xlu0 %v73, 32
    %v86 = vpop.permute.xlu0 %85
    %87 = vrot.lane.b32.xlu0 %v74, 32
    %v88 = vpop.permute.xlu0 %87
    %89 = vrot.lane.b32.xlu0 %v75, 32
    %v90 = vpop.permute.xlu0 %89
    %91 = vrot.lane.b32.xlu0 %v76, 32
    %v92 = vpop.permute.xlu0 %91
    %93 = vrot.lane.b32.xlu0 %v77, 32
    %v94 = vpop.permute.xlu0 %93
    %95 = vrot.lane.b32.xlu0 %v78, 32
    %v96 = vpop.permute.xlu0 %95
    %vm103 = vcmask 261120
    %v104 = vsel %vm103, %v67, %v86
    %v105 = vsel %vm103, %v68, %v88
    %v106 = vsel %vm103, %v69, %v90
    %v107 = vsel %vm103, %v70, %v92
    %v108 = vsel %vm103, %v71, %v94
    %v109 = vsel %vm103, %v72, %v96
    %v110 = vpack.c.bf16 %v105, %v104
    %v111 = vpack.c.bf16 %v107, %v106
    %v112 = vpack.c.bf16 %v109, %v108
    %v113 = vld [vmem:[#allocation2] sm:$0xf]
    %v114 = vld [vmem:[#allocation2 + $0x4] sm:$0xf]
    %v115 = vld [vmem:[#allocation2 + $0x8] sm:$0xf]
    %v116 = vld [vmem:[#allocation2 + $0xc] sm:$0xf]
    %v117 = vld [vmem:[#allocation2 + $0x10] sm:$0xf]
    %v118 = vld [vmem:[#allocation2 + $0x14] sm:$0xf]
    %v119 = vld [vmem:[#allocation2 + $0x18] sm:$0xf]
    %v120 = vld [vmem:[#allocation2 + $0x1c] sm:$0xf]
    %v129 = vunpack.c.l.b16 %v113
    %v130 = vunpack.c.l.b16 %v114
    %v131 = vunpack.c.l.b16 %v115
    %v132 = vunpack.c.l.b16 %v116
    %v133 = vunpack.c.l.b16 %v117
    %v134 = vunpack.c.l.b16 %v118
    %v135 = vunpack.c.l.b16 %v119
    %v136 = vunpack.c.l.b16 %v120
    %v137 = vpack.c.b16 %v130, %v129
    %v138 = vpack.c.b16 %v132, %v131
    %v139 = vpack.c.b16 %v134, %v133
    %v140 = vpack.c.b16 %v136, %v135
    %vm145 = vcmask 523264
    %v147 = vsel %vm145, %v110, 0
    %v150 = vsel %vm145, %v111, 0
    %v153 = vsel %vm145, %v112, 0
    %155 = vmatprep.subr.bf16.mxu0 0
    %156 = vmatpush1.bf16.msra.mxu0 0
    %157 = vmatprep.subr.bf16.mxu0 0
    %158 = vmatpush1.bf16.msra.mxu0 0
    %159 = vmatprep.subr.bf16.mxu0 0
    %160 = vmatpush1.bf16.msra.mxu0 0
    %161 = vmatprep.subr.bf16.mxu0 0
    %162 = vmatpush1.bf16.msra.mxu0 0
    %163 = vmatprep.subr.bf16.mxu0 0
    %164 = vmatpush1.bf16.msra.mxu0 %v140
    %165 = vmatprep.subr.bf16.mxu0 0
    %166 = vmatpush1.bf16.msra.mxu0 %v139
    %167 = vmatprep.subr.bf16.mxu0 0
    %168 = vmatpush1.bf16.msra.mxu0 %v138
    %169 = vmatprep.subr.bf16.mxu0 0
    %170 = vmatpush1.bf16.msra.mxu0 %v137
    %171 = vmatprep.subr.bf16.mxu0 0
    %172 = vmatpush2.bf16.msra.mxu0 0
    %173 = vmatprep.subr.bf16.mxu0 0
    %174 = vmatpush2.bf16.msra.mxu0 0
    %175 = vmatprep.subr.bf16.mxu0 0
    %176 = vmatpush2.bf16.msra.mxu0 0
    %177 = vmatprep.subr.bf16.mxu0 0
    %178 = vmatpush2.bf16.msra.mxu0 0
    %179 = vmatprep.subr.bf16.mxu0 0
    %180 = vmatpush2.bf16.msra.mxu0 0
    %181 = vmatprep.subr.bf16.mxu0 0
    %182 = vmatpush2.bf16.msra.mxu0 0
    %183 = vmatprep.subr.bf16.mxu0 0
    %184 = vmatpush2.bf16.msra.mxu0 0
    %185 = vmatprep.subr.bf16.mxu0 0
    %186 = vmatpush2.bf16.msra.mxu0 0
    %187 = vmatprep.mubr.bf16.mxu0 0
    %188 = vmatmul.mubr.bf16.gmra.mxu0 %v147
    %v189 = vpop.f32.mrf.mxu0
    %v190 = vadd.f32 0.0, %v189
    %v191 = vpop.f32.mrf.mxu0
    %v192 = vpop.f32.mrf.mxu0
    %v193 = vadd.f32 0.0, %v192
    %v194 = vpop.f32.mrf.mxu0
    %195 = vmatprep.mubr.bf16.mxu0 0
    %196 = vmatmul.mubr.bf16.gmra.mxu0 %v150
    %v197 = vpop.f32.mrf.mxu0
    %v198 = vadd.f32 0.0, %v197
    %v199 = vpop.f32.mrf.mxu0
    %v200 = vpop.f32.mrf.mxu0
    %v201 = vadd.f32 0.0, %v200
    %v202 = vpop.f32.mrf.mxu0
    %203 = vmatprep.mubr.bf16.mxu0 0
    %204 = vmatmul.mubr.bf16.gmra.mxu0 %v153
    %v205 = vpop.f32.mrf.mxu0
    %v206 = vadd.f32 0.0, %v205
    %v207 = vpop.f32.mrf.mxu0
    %v208 = vpop.f32.mrf.mxu0
    %v209 = vadd.f32 0.0, %v208
    %v210 = vpop.f32.mrf.mxu0
    %211 = vdwg.mxu0
    %v212 = vlaneseq
    %v213 = vshrl.u32 %v212, 7
    %v214 = vsub.s32 0, %v213
    %v215 = vrot.slane %v40, %v214
    %v216 = vlaneseq
    %v217 = vshrl.u32 %v216, 7
    %v218 = vsub.s32 0, %v217
    %v219 = vrot.slane %v41, %v218
    %v220 = vsel %vm61, %v215, %v219
    %v221 = vsel %vm62, %v215, %v219
    %v222 = vsel %vm63, %v215, %v219
    %v223 = vsel %vm64, %v215, %v219
    %v224 = vsel %vm65, %v215, %v219
    %v225 = vsel %vm66, %v215, %v219
    %v226 = vadd.f32 %v190, %v220
    %v227 = vadd.f32 %v193, %v221
    %v228 = vadd.f32 %v198, %v222
    %v229 = vadd.f32 %v201, %v223
    %v230 = vadd.f32 %v206, %v224
    %v231 = vadd.f32 %v209, %v225
    %v232 = vpack.c.bf16 %v226, %v226
    %234 = vrot.lane.b32.xlu0 %v232, 96
    %v235 = vpop.permute.xlu0 %234
    %v237 = vsel %vm103, %v232, 0
    %v240 = vsel %vm103, %v235, 0
    %242 = vmatprep.subr.bf16.mxu0 0
    %243 = vmatpush1.bf16.xpose.msra.mxu0 0
    %244 = vmatprep.subr.bf16.mxu0 0
    %245 = vmatpush1.bf16.xpose.msra.mxu0 0
    %246 = vmatprep.subr.bf16.mxu0 0
    %247 = vmatpush1.bf16.xpose.msra.mxu0 0
    %248 = vmatprep.subr.bf16.mxu0 0
    %249 = vmatpush1.bf16.xpose.msra.mxu0 0
    %250 = vmatprep.subr.bf16.mxu0 0
    %251 = vmatpush1.bf16.xpose.msra.mxu0 0
    %252 = vmatprep.subr.bf16.mxu0 0
    %253 = vmatpush1.bf16.xpose.msra.mxu0 0
    %254 = vmatprep.subr.bf16.mxu0 0
    %255 = vmatpush1.bf16.xpose.msra.mxu0 0
    %256 = vmatprep.subr.bf16.mxu0 0
    %257 = vmatpush1.bf16.xpose.msra.mxu0 %v240
    %258 = vmatprep.subr.bf16.mxu0 0
    %259 = vmatpush2.bf16.xpose.msra.mxu0 0
    %260 = vmatprep.subr.bf16.mxu0 0
    %261 = vmatpush2.bf16.xpose.msra.mxu0 0
    %262 = vmatprep.subr.bf16.mxu0 0
    %263 = vmatpush2.bf16.xpose.msra.mxu0 0
    %264 = vmatprep.subr.bf16.mxu0 0
    %265 = vmatpush2.bf16.xpose.msra.mxu0 0
    %266 = vmatprep.subr.bf16.mxu0 0
    %267 = vmatpush2.bf16.xpose.msra.mxu0 0
    %268 = vmatprep.subr.bf16.mxu0 0
    %269 = vmatpush2.bf16.xpose.msra.mxu0 0
    %270 = vmatprep.subr.bf16.mxu0 0
    %271 = vmatpush2.bf16.xpose.msra.mxu0 0
    %272 = vmatprep.subr.bf16.mxu0 0
    %273 = vmatpush2.bf16.xpose.msra.mxu0 0
    %274 = vmatprep.mubr.bf16.mxu0 0
    %275 = vmatmul.mubr.bf16.gmra.mxu0 %v237
    %v276 = vpop.f32.mrf.mxu0
    %v277 = vadd.f32 0.0, %v276
    %v278 = vpop.f32.mrf.mxu0
    %v279 = vpop.f32.mrf.mxu0
    %v280 = vpop.f32.mrf.mxu0
    %281 = vdwg.mxu0
    %v282 = vmul.f32 %v277, 0.17677669
    %v283 = vlaneseq
    %v284 = vshrl.u32 %v283, 7
    %v285 = vsub.s32 0, %v284
    %v286 = vrot.slane %v39, %v285
    %v287 = vadd.f32 %v282, %v286
    %vm288 = vcmask 64512
    %v289 = vsel %vm288, %v287, -inf
    %290 = vmax.xlane.f32.xlu0 %v289
    %v291 = vpop.xlane.xlu0 %290
    %v292 = vsub.f32 %v287, %v291
    %v293 = vmul.f32 %v292, 1.442695
    %v294 = vpow.pop %v293
    %v295 = vsel %vm288, %v294, 0.0
    %296 = vadd.xlane.f32.xlu0 %v295
    %v297 = vpop.xlane.xlu0 %296
    %v298 = vrcp.pop %v297
    %v299 = vmul.f32 %v294, %v298
    %v300 = vpack.c.bf16 %v299, %v299
    %301 = vrot.lane.b32.xlu0 %v232, 64
    %v302 = vpop.permute.xlu0 %301
    %v304 = vsel %vm288, %v300, 0
    %vm306 = vcmask 1043456
    %v308 = vsel %vm306, %v302, 0
    %310 = vmatprep.subr.bf16.mxu0 0
    %311 = vmatpush1.bf16.msra.mxu0 0
    %312 = vmatprep.subr.bf16.mxu0 0
    %313 = vmatpush1.bf16.msra.mxu0 0
    %314 = vmatprep.subr.bf16.mxu0 0
    %315 = vmatpush1.bf16.msra.mxu0 0
    %316 = vmatprep.subr.bf16.mxu0 0
    %317 = vmatpush1.bf16.msra.mxu0 0
    %318 = vmatprep.subr.bf16.mxu0 0
    %319 = vmatpush1.bf16.msra.mxu0 0
    %320 = vmatprep.subr.bf16.mxu0 0
    %321 = vmatpush1.bf16.msra.mxu0 0
    %322 = vmatprep.subr.bf16.mxu0 0
    %323 = vmatpush1.bf16.msra.mxu0 0
    %324 = vmatprep.subr.bf16.mxu0 0
    %325 = vmatpush1.bf16.msra.mxu0 %v308
    %326 = vmatprep.subr.bf16.mxu0 0
    %327 = vmatpush2.bf16.msra.mxu0 0
    %328 = vmatprep.subr.bf16.mxu0 0
    %329 = vmatpush2.bf16.msra.mxu0 0
    %330 = vmatprep.subr.bf16.mxu0 0
    %331 = vmatpush2.bf16.msra.mxu0 0
    %332 = vmatprep.subr.bf16.mxu0 0
    %333 = vmatpush2.bf16.msra.mxu0 0
    %334 = vmatprep.subr.bf16.mxu0 0
    %335 = vmatpush2.bf16.msra.mxu0 0
    %336 = vmatprep.subr.bf16.mxu0 0
    %337 = vmatpush2.bf16.msra.mxu0 0
    %338 = vmatprep.subr.bf16.mxu0 0
    %339 = vmatpush2.bf16.msra.mxu0 0
    %340 = vmatprep.subr.bf16.mxu0 0
    %341 = vmatpush2.bf16.msra.mxu0 0
    %342 = vmatprep.mubr.bf16.mxu0 0
    %343 = vmatmul.mubr.bf16.gmra.mxu0 %v304
    %v344 = vpop.f32.mrf.mxu0
    %v345 = vadd.f32 0.0, %v344
    %v346 = vpop.f32.mrf.mxu0
    %v347 = vpop.f32.mrf.mxu0
    %v348 = vpop.f32.mrf.mxu0
    %349 = vdwg.mxu0
    %v350 = vpack.c.bf16 %v227, %v227
    %352 = vrot.lane.b32.xlu0 %v350, 96
    %v353 = vpop.permute.xlu0 %352
    %v355 = vsel %vm103, %v350, 0
    %v358 = vsel %vm103, %v353, 0
    %360 = vmatprep.subr.bf16.mxu0 0
    %361 = vmatpush1.bf16.xpose.msra.mxu0 0
    %362 = vmatprep.subr.bf16.mxu0 0
    %363 = vmatpush1.bf16.xpose.msra.mxu0 0
    %364 = vmatprep.subr.bf16.mxu0 0
    %365 = vmatpush1.bf16.xpose.msra.mxu0 0
    %366 = vmatprep.subr.bf16.mxu0 0
    %367 = vmatpush1.bf16.xpose.msra.mxu0 0
    %368 = vmatprep.subr.bf16.mxu0 0
    %369 = vmatpush1.bf16.xpose.msra.mxu0 0
    %370 = vmatprep.subr.bf16.mxu0 0
    %371 = vmatpush1.bf16.xpose.msra.mxu0 0
    %372 = vmatprep.subr.bf16.mxu0 0
    %373 = vmatpush1.bf16.xpose.msra.mxu0 0
    %374 = vmatprep.subr.bf16.mxu0 0
    %375 = vmatpush1.bf16.xpose.msra.mxu0 %v358
    %376 = vmatprep.subr.bf16.mxu0 0
    %377 = vmatpush2.bf16.xpose.msra.mxu0 0
    %378 = vmatprep.subr.bf16.mxu0 0
    %379 = vmatpush2.bf16.xpose.msra.mxu0 0
    %380 = vmatprep.subr.bf16.mxu0 0
    %381 = vmatpush2.bf16.xpose.msra.mxu0 0
    %382 = vmatprep.subr.bf16.mxu0 0
    %383 = vmatpush2.bf16.xpose.msra.mxu0 0
    %384 = vmatprep.subr.bf16.mxu0 0
    %385 = vmatpush2.bf16.xpose.msra.mxu0 0
    %386 = vmatprep.subr.bf16.mxu0 0
    %387 = vmatpush2.bf16.xpose.msra.mxu0 0
    %388 = vmatprep.subr.bf16.mxu0 0
    %389 = vmatpush2.bf16.xpose.msra.mxu0 0
    %390 = vmatprep.subr.bf16.mxu0 0
    %391 = vmatpush2.bf16.xpose.msra.mxu0 0
    %392 = vmatprep.mubr.bf16.mxu0 0
    %393 = vmatmul.mubr.bf16.gmra.mxu0 %v355
    %v394 = vpop.f32.mrf.mxu0
    %v395 = vadd.f32 0.0, %v394
    %v396 = vpop.f32.mrf.mxu0
    %v397 = vpop.f32.mrf.mxu0
    %v398 = vpop.f32.mrf.mxu0
    %399 = vdwg.mxu0
    %v400 = vmul.f32 %v395, 0.17677669
    %v401 = vlaneseq
    %v402 = vshrl.u32 %v401, 7
    %v403 = vsub.s32 1, %v402
    %v404 = vrot.slane %v39, %v403
    %v405 = vadd.f32 %v400, %v404
    %v406 = vsel %vm288, %v405, -inf
    %407 = vmax.xlane.f32.xlu0 %v406
    %v408 = vpop.xlane.xlu0 %407
    %v409 = vsub.f32 %v405, %v408
    %v410 = vmul.f32 %v409, 1.442695
    %v411 = vpow.pop %v410
    %v412 = vsel %vm288, %v411, 0.0
    %413 = vadd.xlane.f32.xlu0 %v412
    %v414 = vpop.xlane.xlu0 %413
    %v415 = vrcp.pop %v414
    %v416 = vmul.f32 %v411, %v415
    %v417 = vpack.c.bf16 %v416, %v416
    %418 = vrot.lane.b32.xlu0 %v350, 64
    %v419 = vpop.permute.xlu0 %418
    %v421 = vsel %vm288, %v417, 0
    %v424 = vsel %vm306, %v419, 0
    %426 = vmatprep.subr.bf16.mxu0 0
    %427 = vmatpush1.bf16.msra.mxu0 0
    %428 = vmatprep.subr.bf16.mxu0 0
    %429 = vmatpush1.bf16.msra.mxu0 0
    %430 = vmatprep.subr.bf16.mxu0 0
    %431 = vmatpush1.bf16.msra.mxu0 0
    %432 = vmatprep.subr.bf16.mxu0 0
    %433 = vmatpush1.bf16.msra.mxu0 0
    %434 = vmatprep.subr.bf16.mxu0 0
    %435 = vmatpush1.bf16.msra.mxu0 0
    %436 = vmatprep.subr.bf16.mxu0 0
    %437 = vmatpush1.bf16.msra.mxu0 0
    %438 = vmatprep.subr.bf16.mxu0 0
    %439 = vmatpush1.bf16.msra.mxu0 0
    %440 = vmatprep.subr.bf16.mxu0 0
    %441 = vmatpush1.bf16.msra.mxu0 %v424
    %442 = vmatprep.subr.bf16.mxu0 0
    %443 = vmatpush2.bf16.msra.mxu0 0
    %444 = vmatprep.subr.bf16.mxu0 0
    %445 = vmatpush2.bf16.msra.mxu0 0
    %446 = vmatprep.subr.bf16.mxu0 0
    %447 = vmatpush2.bf16.msra.mxu0 0
    %448 = vmatprep.subr.bf16.mxu0 0
    %449 = vmatpush2.bf16.msra.mxu0 0
    %450 = vmatprep.subr.bf16.mxu0 0
    %451 = vmatpush2.bf16.msra.mxu0 0
    %452 = vmatprep.subr.bf16.mxu0 0
    %453 = vmatpush2.bf16.msra.mxu0 0
    %454 = vmatprep.subr.bf16.mxu0 0
    %455 = vmatpush2.bf16.msra.mxu0 0
    %456 = vmatprep.subr.bf16.mxu0 0
    %457 = vmatpush2.bf16.msra.mxu0 0
    %458 = vmatprep.mubr.bf16.mxu0 0
    %459 = vmatmul.mubr.bf16.gmra.mxu0 %v421
    %v460 = vpop.f32.mrf.mxu0
    %v461 = vadd.f32 0.0, %v460
    %v462 = vpop.f32.mrf.mxu0
    %v463 = vpop.f32.mrf.mxu0
    %v464 = vpop.f32.mrf.mxu0
    %465 = vdwg.mxu0
    %v466 = vpack.c.bf16 %v229, %v228
    %468 = vrot.lane.b32.xlu0 %v466, 96
    %v469 = vpop.permute.xlu0 %468
    %v471 = vsel %vm103, %v466, 0
    %v474 = vsel %vm103, %v469, 0
    %476 = vmatprep.subr.bf16.mxu0 0
    %477 = vmatpush1.bf16.xpose.msra.mxu0 0
    %478 = vmatprep.subr.bf16.mxu0 0
    %479 = vmatpush1.bf16.xpose.msra.mxu0 0
    %480 = vmatprep.subr.bf16.mxu0 0
    %481 = vmatpush1.bf16.xpose.msra.mxu0 0
    %482 = vmatprep.subr.bf16.mxu0 0
    %483 = vmatpush1.bf16.xpose.msra.mxu0 0
    %484 = vmatprep.subr.bf16.mxu0 0
    %485 = vmatpush1.bf16.xpose.msra.mxu0 0
    %486 = vmatprep.subr.bf16.mxu0 0
    %487 = vmatpush1.bf16.xpose.msra.mxu0 0
    %488 = vmatprep.subr.bf16.mxu0 0
    %489 = vmatpush1.bf16.xpose.msra.mxu0 0
    %490 = vmatprep.subr.bf16.mxu0 0
    %491 = vmatpush1.bf16.xpose.msra.mxu0 %v474
    %492 = vmatprep.subr.bf16.mxu0 0
    %493 = vmatpush2.bf16.xpose.msra.mxu0 0
    %494 = vmatprep.subr.bf16.mxu0 0
    %495 = vmatpush2.bf16.xpose.msra.mxu0 0
    %496 = vmatprep.subr.bf16.mxu0 0
    %497 = vmatpush2.bf16.xpose.msra.mxu0 0
    %498 = vmatprep.subr.bf16.mxu0 0
    %499 = vmatpush2.bf16.xpose.msra.mxu0 0
    %500 = vmatprep.subr.bf16.mxu0 0
    %501 = vmatpush2.bf16.xpose.msra.mxu0 0
    %502 = vmatprep.subr.bf16.mxu0 0
    %503 = vmatpush2.bf16.xpose.msra.mxu0 0
    %504 = vmatprep.subr.bf16.mxu0 0
    %505 = vmatpush2.bf16.xpose.msra.mxu0 0
    %506 = vmatprep.subr.bf16.mxu0 0
    %507 = vmatpush2.bf16.xpose.msra.mxu0 0
    %508 = vmatprep.mubr.bf16.mxu0 0
    %509 = vmatmul.mubr.bf16.gmra.mxu0 %v471
    %v510 = vpop.f32.mrf.mxu0
    %v511 = vadd.f32 0.0, %v510
    %v512 = vpop.f32.mrf.mxu0
    %v513 = vpop.f32.mrf.mxu0
    %v514 = vadd.f32 0.0, %v513
    %v515 = vpop.f32.mrf.mxu0
    %516 = vdwg.mxu0
    %v517 = vmul.f32 %v511, 0.17677669
    %v518 = vmul.f32 %v514, 0.17677669
    %v519 = vlaneseq
    %v520 = vshrl.u32 %v519, 7
    %v521 = vsub.s32 2, %v520
    %v522 = vrot.slane %v39, %v521
    %v523 = vadd.f32 %v517, %v522
    %v524 = vadd.f32 %v518, %v522
    %vm525 = vcmask 130048
    %v526 = vsel %vm525, %v523, -inf
    %527 = vmax.xlane.f32.xlu0 %v526
    %v528 = vpop.xlane.xlu0 %527
    %v529 = vsel %vm525, %v524, -inf
    %530 = vmax.xlane.f32.xlu0 %v529
    %v531 = vpop.xlane.xlu0 %530
    %v532 = vsub.f32 %v523, %v528
    %v533 = vsub.f32 %v524, %v531
    %v534 = vmul.f32 %v532, 1.442695
    %v535 = vpow.pop %v534
    %v536 = vmul.f32 %v533, 1.442695
    %v537 = vpow.pop %v536
    %v538 = vsel %vm525, %v535, 0.0
    %539 = vadd.xlane.f32.xlu0 %v538
    %v540 = vpop.xlane.xlu0 %539
    %v541 = vsel %vm525, %v537, 0.0
    %542 = vadd.xlane.f32.xlu0 %v541
    %v543 = vpop.xlane.xlu0 %542
    %v544 = vrcp.pop %v540
    %v545 = vrcp.pop %v543
    %v546 = vmul.f32 %v535, %v544
    %v547 = vmul.f32 %v537, %v545
    %v548 = vpack.c.bf16 %v547, %v546
    %549 = vrot.lane.b32.xlu0 %v466, 64
    %v550 = vpop.permute.xlu0 %549
    %v553 = vsel %vm525, %v548, 0
    %555 = vmatprep.subr.bf16.mxu0 0
    %556 = vmatpush1.bf16.msra.mxu0 0
    %557 = vmatprep.subr.bf16.mxu0 0
    %558 = vmatpush1.bf16.msra.mxu0 0
    %559 = vmatprep.subr.bf16.mxu0 0
    %560 = vmatpush1.bf16.msra.mxu0 0
    %561 = vmatprep.subr.bf16.mxu0 0
    %562 = vmatpush1.bf16.msra.mxu0 0
    %563 = vmatprep.subr.bf16.mxu0 0
    %564 = vmatpush1.bf16.msra.mxu0 0
    %565 = vmatprep.subr.bf16.mxu0 0
    %566 = vmatpush1.bf16.msra.mxu0 0
    %567 = vmatprep.subr.bf16.mxu0 0
    %568 = vmatpush1.bf16.msra.mxu0 0
    %569 = vmatprep.subr.bf16.mxu0 0
    %570 = vmatpush1.bf16.msra.mxu0 %v550
    %571 = vmatprep.subr.bf16.mxu0 0
    %572 = vmatpush2.bf16.msra.mxu0 0
    %573 = vmatprep.subr.bf16.mxu0 0
    %574 = vmatpush2.bf16.msra.mxu0 0
    %575 = vmatprep.subr.bf16.mxu0 0
    %576 = vmatpush2.bf16.msra.mxu0 0
    %577 = vmatprep.subr.bf16.mxu0 0
    %578 = vmatpush2.bf16.msra.mxu0 0
    %579 = vmatprep.subr.bf16.mxu0 0
    %580 = vmatpush2.bf16.msra.mxu0 0
    %581 = vmatprep.subr.bf16.mxu0 0
    %582 = vmatpush2.bf16.msra.mxu0 0
    %583 = vmatprep.subr.bf16.mxu0 0
    %584 = vmatpush2.bf16.msra.mxu0 0
    %585 = vmatprep.subr.bf16.mxu0 0
    %586 = vmatpush2.bf16.msra.mxu0 0
    %587 = vmatprep.mubr.bf16.mxu0 0
    %588 = vmatmul.mubr.bf16.gmra.mxu0 %v553
    %v589 = vpop.f32.mrf.mxu0
    %v590 = vadd.f32 0.0, %v589
    %v591 = vpop.f32.mrf.mxu0
    %v592 = vpop.f32.mrf.mxu0
    %v593 = vadd.f32 0.0, %v592
    %v594 = vpop.f32.mrf.mxu0
    %595 = vdwg.mxu0
    %v596 = vpack.c.bf16 %v231, %v230
    %598 = vrot.lane.b32.xlu0 %v596, 96
    %v599 = vpop.permute.xlu0 %598
    %v601 = vsel %vm103, %v596, 0
    %v604 = vsel %vm103, %v599, 0
    %606 = vmatprep.subr.bf16.mxu0 0
    %607 = vmatpush1.bf16.xpose.msra.mxu0 0
    %608 = vmatprep.subr.bf16.mxu0 0
    %609 = vmatpush1.bf16.xpose.msra.mxu0 0
    %610 = vmatprep.subr.bf16.mxu0 0
    %611 = vmatpush1.bf16.xpose.msra.mxu0 0
    %612 = vmatprep.subr.bf16.mxu0 0
    %613 = vmatpush1.bf16.xpose.msra.mxu0 0
    %614 = vmatprep.subr.bf16.mxu0 0
    %615 = vmatpush1.bf16.xpose.msra.mxu0 0
    %616 = vmatprep.subr.bf16.mxu0 0
    %617 = vmatpush1.bf16.xpose.msra.mxu0 0
    %618 = vmatprep.subr.bf16.mxu0 0
    %619 = vmatpush1.bf16.xpose.msra.mxu0 0
    %620 = vmatprep.subr.bf16.mxu0 0
    %621 = vmatpush1.bf16.xpose.msra.mxu0 %v604
    %622 = vmatprep.subr.bf16.mxu0 0
    %623 = vmatpush2.bf16.xpose.msra.mxu0 0
    %624 = vmatprep.subr.bf16.mxu0 0
    %625 = vmatpush2.bf16.xpose.msra.mxu0 0
    %626 = vmatprep.subr.bf16.mxu0 0
    %627 = vmatpush2.bf16.xpose.msra.mxu0 0
    %628 = vmatprep.subr.bf16.mxu0 0
    %629 = vmatpush2.bf16.xpose.msra.mxu0 0
    %630 = vmatprep.subr.bf16.mxu0 0
    %631 = vmatpush2.bf16.xpose.msra.mxu0 0
    %632 = vmatprep.subr.bf16.mxu0 0
    %633 = vmatpush2.bf16.xpose.msra.mxu0 0
    %634 = vmatprep.subr.bf16.mxu0 0
    %635 = vmatpush2.bf16.xpose.msra.mxu0 0
    %636 = vmatprep.subr.bf16.mxu0 0
    %637 = vmatpush2.bf16.xpose.msra.mxu0 0
    %638 = vmatprep.mubr.bf16.mxu0 0
    %639 = vmatmul.mubr.bf16.gmra.mxu0 %v601
    %v640 = vpop.f32.mrf.mxu0
    %v641 = vadd.f32 0.0, %v640
    %v642 = vpop.f32.mrf.mxu0
    %v643 = vpop.f32.mrf.mxu0
    %v644 = vadd.f32 0.0, %v643
    %v645 = vpop.f32.mrf.mxu0
    %646 = vdwg.mxu0
    %v647 = vmul.f32 %v641, 0.17677669
    %v648 = vmul.f32 %v644, 0.17677669
    %v649 = vlaneseq
    %v650 = vshrl.u32 %v649, 7
    %v651 = vsub.s32 3, %v650
    %v652 = vrot.slane %v39, %v651
    %v653 = vadd.f32 %v647, %v652
    %v654 = vadd.f32 %v648, %v652
    %v655 = vsel %vm525, %v653, -inf
    %656 = vmax.xlane.f32.xlu0 %v655
    %v657 = vpop.xlane.xlu0 %656
    %v658 = vsel %vm525, %v654, -inf
    %659 = vmax.xlane.f32.xlu0 %v658
    %v660 = vpop.xlane.xlu0 %659
    %v661 = vsub.f32 %v653, %v657
    %v662 = vsub.f32 %v654, %v660
    %v663 = vmul.f32 %v661, 1.442695
    %v664 = vpow.pop %v663
    %v665 = vmul.f32 %v662, 1.442695
    %v666 = vpow.pop %v665
    %v667 = vsel %vm525, %v664, 0.0
    %668 = vadd.xlane.f32.xlu0 %v667
    %v669 = vpop.xlane.xlu0 %668
    %v670 = vsel %vm525, %v666, 0.0
    %671 = vadd.xlane.f32.xlu0 %v670
    %v672 = vpop.xlane.xlu0 %671
    %v673 = vrcp.pop %v669
    %v674 = vrcp.pop %v672
    %v675 = vmul.f32 %v664, %v673
    %v676 = vmul.f32 %v666, %v674
    %v677 = vpack.c.bf16 %v676, %v675
    %678 = vrot.lane.b32.xlu0 %v596, 64
    %v679 = vpop.permute.xlu0 %678
    %v682 = vsel %vm525, %v677, 0
    %684 = vmatprep.subr.bf16.mxu0 0
    %685 = vmatpush1.bf16.msra.mxu0 0
    %686 = vmatprep.subr.bf16.mxu0 0
    %687 = vmatpush1.bf16.msra.mxu0 0
    %688 = vmatprep.subr.bf16.mxu0 0
    %689 = vmatpush1.bf16.msra.mxu0 0
    %690 = vmatprep.subr.bf16.mxu0 0
    %691 = vmatpush1.bf16.msra.mxu0 0
    %692 = vmatprep.subr.bf16.mxu0 0
    %693 = vmatpush1.bf16.msra.mxu0 0
    %694 = vmatprep.subr.bf16.mxu0 0
    %695 = vmatpush1.bf16.msra.mxu0 0
    %696 = vmatprep.subr.bf16.mxu0 0
    %697 = vmatpush1.bf16.msra.mxu0 0
    %698 = vmatprep.subr.bf16.mxu0 0
    %699 = vmatpush1.bf16.msra.mxu0 %v679
    %700 = vmatprep.subr.bf16.mxu0 0
    %701 = vmatpush2.bf16.msra.mxu0 0
    %702 = vmatprep.subr.bf16.mxu0 0
    %703 = vmatpush2.bf16.msra.mxu0 0
    %704 = vmatprep.subr.bf16.mxu0 0
    %705 = vmatpush2.bf16.msra.mxu0 0
    %706 = vmatprep.subr.bf16.mxu0 0
    %707 = vmatpush2.bf16.msra.mxu0 0
    %708 = vmatprep.subr.bf16.mxu0 0
    %709 = vmatpush2.bf16.msra.mxu0 0
    %710 = vmatprep.subr.bf16.mxu0 0
    %711 = vmatpush2.bf16.msra.mxu0 0
    %712 = vmatprep.subr.bf16.mxu0 0
    %713 = vmatpush2.bf16.msra.mxu0 0
    %714 = vmatprep.subr.bf16.mxu0 0
    %715 = vmatpush2.bf16.msra.mxu0 0
    %716 = vmatprep.mubr.bf16.mxu0 0
    %717 = vmatmul.mubr.bf16.gmra.mxu0 %v682
    %v718 = vpop.f32.mrf.mxu0
    %v719 = vadd.f32 0.0, %v718
    %v720 = vpop.f32.mrf.mxu0
    %v721 = vpop.f32.mrf.mxu0
    %v722 = vadd.f32 0.0, %v721
    %v723 = vpop.f32.mrf.mxu0
    %724 = vdwg.mxu0
    %v725 = vsel %vm61, %v345, 0.0
    %v726 = vsel %vm62, %v461, 0.0
    %v727 = vsel %vm63, %v590, 0.0
    %v728 = vsel %vm64, %v593, 0.0
    %v729 = vsel %vm65, %v719, 0.0
    %v730 = vsel %vm66, %v722, 0.0
    %v731 = vsel %vm61, 0.0, %v345
    %v732 = vsel %vm62, 0.0, %v461
    %v733 = vsel %vm63, 0.0, %v590
    %v734 = vsel %vm64, 0.0, %v593
    %v735 = vsel %vm65, 0.0, %v719
    %v736 = vsel %vm66, 0.0, %v722
    %743 = vrot.lane.b32.xlu0 %v731, 32
    %v744 = vpop.permute.xlu0 %743
    %745 = vrot.lane.b32.xlu0 %v732, 32
    %v746 = vpop.permute.xlu0 %745
    %747 = vrot.lane.b32.xlu0 %v733, 32
    %v748 = vpop.permute.xlu0 %747
    %749 = vrot.lane.b32.xlu0 %v734, 32
    %v750 = vpop.permute.xlu0 %749
    %751 = vrot.lane.b32.xlu0 %v735, 32
    %v752 = vpop.permute.xlu0 %751
    %753 = vrot.lane.b32.xlu0 %v736, 32
    %v754 = vpop.permute.xlu0 %753
    %v761 = vsel %vm103, %v725, %v744
    %v762 = vsel %vm103, %v726, %v746
    %v763 = vsel %vm103, %v727, %v748
    %v764 = vsel %vm103, %v728, %v750
    %v765 = vsel %vm103, %v729, %v752
    %v766 = vsel %vm103, %v730, %v754
    %v767 = vpack.c.bf16 %v762, %v761
    %v768 = vpack.c.bf16 %v764, %v763
    %v769 = vpack.c.bf16 %v766, %v765
    %v770 = vld [vmem:[#allocation2 + $0x20] sm:$0xf]
    %v771 = vld [vmem:[#allocation2 + $0x24] sm:$0xf]
    %v772 = vld [vmem:[#allocation2 + $0x28] sm:$0xf]
    %v773 = vld [vmem:[#allocation2 + $0x2c] sm:$0xf]
    %v774 = vld [vmem:[#allocation2 + $0x30] sm:$0xf]
    %v775 = vld [vmem:[#allocation2 + $0x34] sm:$0xf]
    %v776 = vld [vmem:[#allocation2 + $0x38] sm:$0xf]
    %v777 = vld [vmem:[#allocation2 + $0x3c] sm:$0xf]
    %v786 = vunpack.c.l.b16 %v770
    %v787 = vunpack.c.l.b16 %v771
    %v788 = vunpack.c.l.b16 %v772
    %v789 = vunpack.c.l.b16 %v773
    %v790 = vunpack.c.l.b16 %v774
    %v791 = vunpack.c.l.b16 %v775
    %v792 = vunpack.c.l.b16 %v776
    %v793 = vunpack.c.l.b16 %v777
    %v794 = vpack.c.b16 %v787, %v786
    %v795 = vpack.c.b16 %v789, %v788
    %v796 = vpack.c.b16 %v791, %v790
    %v797 = vpack.c.b16 %v793, %v792
    %v803 = vsel %vm145, %v767, 0
    %v806 = vsel %vm145, %v768, 0
    %v809 = vsel %vm145, %v769, 0
    %811 = vmatprep.subr.bf16.mxu0 0
    %812 = vmatpush1.bf16.msra.mxu0 0
    %813 = vmatprep.subr.bf16.mxu0 0
    %814 = vmatpush1.bf16.msra.mxu0 0
    %815 = vmatprep.subr.bf16.mxu0 0
    %816 = vmatpush1.bf16.msra.mxu0 0
    %817 = vmatprep.subr.bf16.mxu0 0
    %818 = vmatpush1.bf16.msra.mxu0 0
    %819 = vmatprep.subr.bf16.mxu0 0
    %820 = vmatpush1.bf16.msra.mxu0 %v797
    %821 = vmatprep.subr.bf16.mxu0 0
    %822 = vmatpush1.bf16.msra.mxu0 %v796
    %823 = vmatprep.subr.bf16.mxu0 0
    %824 = vmatpush1.bf16.msra.mxu0 %v795
    %825 = vmatprep.subr.bf16.mxu0 0
    %826 = vmatpush1.bf16.msra.mxu0 %v794
    %827 = vmatprep.subr.bf16.mxu0 0
    %828 = vmatpush2.bf16.msra.mxu0 0
    %829 = vmatprep.subr.bf16.mxu0 0
    %830 = vmatpush2.bf16.msra.mxu0 0
    %831 = vmatprep.subr.bf16.mxu0 0
    %832 = vmatpush2.bf16.msra.mxu0 0
    %833 = vmatprep.subr.bf16.mxu0 0
    %834 = vmatpush2.bf16.msra.mxu0 0
    %835 = vmatprep.subr.bf16.mxu0 0
    %836 = vmatpush2.bf16.msra.mxu0 0
    %837 = vmatprep.subr.bf16.mxu0 0
    %838 = vmatpush2.bf16.msra.mxu0 0
    %839 = vmatprep.subr.bf16.mxu0 0
    %840 = vmatpush2.bf16.msra.mxu0 0
    %841 = vmatprep.subr.bf16.mxu0 0
    %842 = vmatpush2.bf16.msra.mxu0 0
    %843 = vmatprep.mubr.bf16.mxu0 0
    %844 = vmatmul.mubr.bf16.gmra.mxu0 %v803
    %v845 = vpop.f32.mrf.mxu0
    %v846 = vadd.f32 0.0, %v845
    %v847 = vpop.f32.mrf.mxu0
    %v848 = vpop.f32.mrf.mxu0
    %v849 = vadd.f32 0.0, %v848
    %v850 = vpop.f32.mrf.mxu0
    %851 = vmatprep.mubr.bf16.mxu0 0
    %852 = vmatmul.mubr.bf16.gmra.mxu0 %v806
    %v853 = vpop.f32.mrf.mxu0
    %v854 = vadd.f32 0.0, %v853
    %v855 = vpop.f32.mrf.mxu0
    %v856 = vpop.f32.mrf.mxu0
    %v857 = vadd.f32 0.0, %v856
    %v858 = vpop.f32.mrf.mxu0
    %859 = vmatprep.mubr.bf16.mxu0 0
    %860 = vmatmul.mubr.bf16.gmra.mxu0 %v809
    %v861 = vpop.f32.mrf.mxu0
    %v862 = vadd.f32 0.0, %v861
    %v863 = vpop.f32.mrf.mxu0
    %v864 = vpop.f32.mrf.mxu0
    %v865 = vadd.f32 0.0, %v864
    %v866 = vpop.f32.mrf.mxu0
    %867 = vdwg.mxu0
    %v868 = vlaneseq
    %v869 = vshrl.u32 %v868, 7
    %v870 = vsub.s32 1, %v869
    %v871 = vrot.slane %v40, %v870
    %v872 = vlaneseq
    %v873 = vshrl.u32 %v872, 7
    %v874 = vsub.s32 1, %v873
    %v875 = vrot.slane %v41, %v874
    %v876 = vsel %vm61, %v871, %v875
    %v877 = vsel %vm62, %v871, %v875
    %v878 = vsel %vm63, %v871, %v875
    %v879 = vsel %vm64, %v871, %v875
    %v880 = vsel %vm65, %v871, %v875
    %v881 = vsel %vm66, %v871, %v875
    %v882 = vadd.f32 %v846, %v876
    %v883 = vadd.f32 %v849, %v877
    %v884 = vadd.f32 %v854, %v878
    %v885 = vadd.f32 %v857, %v879
    %v886 = vadd.f32 %v862, %v880
    %v887 = vadd.f32 %v865, %v881
    %v888 = vadd.f32 %v33, %v882
    %v889 = vadd.f32 %v34, %v883
    %v890 = vadd.f32 %v35, %v884
    %v891 = vadd.f32 %v36, %v885
    %v892 = vadd.f32 %v37, %v886
    %v893 = vadd.f32 %v38, %v887
    %v894 = vlaneseq
    %v895 = vshrl.u32 %v894, 7
    %v896 = vsub.s32 4, %v895
    %v897 = vrot.slane %v40, %v896
    %v898 = vlaneseq
    %v899 = vshrl.u32 %v898, 7
    %v900 = vsub.s32 4, %v899
    %v901 = vrot.slane %v41, %v900
    %v902 = vsel %vm61, %v897, %v901
    %v903 = vsel %vm62, %v897, %v901
    %v904 = vsel %vm63, %v897, %v901
    %v905 = vsel %vm64, %v897, %v901
    %v906 = vsel %vm65, %v897, %v901
    %v907 = vsel %vm66, %v897, %v901
    %v908 = vlaneseq
    %v909 = vshrl.u32 %v908, 7
    %v910 = vsub.s32 5, %v909
    %v911 = vrot.slane %v40, %v910
    %v912 = vlaneseq
    %v913 = vshrl.u32 %v912, 7
    %v914 = vsub.s32 5, %v913
    %v915 = vrot.slane %v41, %v914
    %v916 = vsel %vm61, %v911, %v915
    %v917 = vsel %vm62, %v911, %v915
    %v918 = vsel %vm63, %v911, %v915
    %v919 = vsel %vm64, %v911, %v915
    %v920 = vsel %vm65, %v911, %v915
    %v921 = vsel %vm66, %v911, %v915
    %v922 = vsel %vm103, %v888, 0.0
    %923 = vadd.xlane.f32.xlu0 %v922
    %v924 = vpop.xlane.xlu0 %923
    %v925 = vsel %vm103, %v889, 0.0
    %926 = vadd.xlane.f32.xlu0 %v925
    %v927 = vpop.xlane.xlu0 %926
    %v928 = vsel %vm103, %v890, 0.0
    %929 = vadd.xlane.f32.xlu0 %v928
    %v930 = vpop.xlane.xlu0 %929
    %v931 = vsel %vm103, %v891, 0.0
    %932 = vadd.xlane.f32.xlu0 %v931
    %v933 = vpop.xlane.xlu0 %932
    %v934 = vsel %vm103, %v892, 0.0
    %935 = vadd.xlane.f32.xlu0 %v934
    %v936 = vpop.xlane.xlu0 %935
    %v937 = vsel %vm103, %v893, 0.0
    %938 = vadd.xlane.f32.xlu0 %v937
    %v939 = vpop.xlane.xlu0 %938
    %v940 = vrcp.pop 32.0
    %v941 = vmul.f32 %v924, %v940
    %v942 = vmul.f32 %v927, %v940
    %v943 = vmul.f32 %v930, %v940
    %v944 = vmul.f32 %v933, %v940
    %v945 = vmul.f32 %v936, %v940
    %v946 = vmul.f32 %v939, %v940
    %v947 = vsub.f32 %v888, %v941
    %v948 = vsub.f32 %v889, %v942
    %v949 = vsub.f32 %v890, %v943
    %v950 = vsub.f32 %v891, %v944
    %v951 = vsub.f32 %v892, %v945
    %v952 = vsub.f32 %v893, %v946
    %v953 = vmul.f32 %v947, %v947
    %v954 = vmul.f32 %v948, %v948
    %v955 = vmul.f32 %v949, %v949
    %v956 = vmul.f32 %v950, %v950
    %v957 = vmul.f32 %v951, %v951
    %v958 = vmul.f32 %v952, %v952
    %v959 = vsel %vm103, %v953, 0.0
    %960 = vadd.xlane.f32.xlu0 %v959
    %v961 = vpop.xlane.xlu0 %960
    %v962 = vsel %vm103, %v954, 0.0
    %963 = vadd.xlane.f32.xlu0 %v962
    %v964 = vpop.xlane.xlu0 %963
    %v965 = vsel %vm103, %v955, 0.0
    %966 = vadd.xlane.f32.xlu0 %v965
    %v967 = vpop.xlane.xlu0 %966
    %v968 = vsel %vm103, %v956, 0.0
    %969 = vadd.xlane.f32.xlu0 %v968
    %v970 = vpop.xlane.xlu0 %969
    %v971 = vsel %vm103, %v957, 0.0
    %972 = vadd.xlane.f32.xlu0 %v971
    %v973 = vpop.xlane.xlu0 %972
    %v974 = vsel %vm103, %v958, 0.0
    %975 = vadd.xlane.f32.xlu0 %v974
    %v976 = vpop.xlane.xlu0 %975
    %v977 = vmul.f32 %v961, %v940
    %v978 = vmul.f32 %v964, %v940
    %v979 = vmul.f32 %v967, %v940
    %v980 = vmul.f32 %v970, %v940
    %v981 = vmul.f32 %v973, %v940
    %v982 = vmul.f32 %v976, %v940
    %v983 = vadd.f32 %v977, 1e-05
    %v984 = vadd.f32 %v978, 1e-05
    %v985 = vadd.f32 %v979, 1e-05
    %v986 = vadd.f32 %v980, 1e-05
    %v987 = vadd.f32 %v981, 1e-05
    %v988 = vadd.f32 %v982, 1e-05
    %v989 = vrsqrt.pop %v983
    %v990 = vrsqrt.pop %v984
    %v991 = vrsqrt.pop %v985
    %v992 = vrsqrt.pop %v986
    %v993 = vrsqrt.pop %v987
    %v994 = vrsqrt.pop %v988
    %v995 = vmul.f32 %v947, %v989
    %v996 = vmul.f32 %v948, %v990
    %v997 = vmul.f32 %v949, %v991
    %v998 = vmul.f32 %v950, %v992
    %v999 = vmul.f32 %v951, %v993
    %v1000 = vmul.f32 %v952, %v994
    %v1001 = vmul.f32 %v995, %v902
    %v1002 = vmul.f32 %v996, %v903
    %v1003 = vmul.f32 %v997, %v904
    %v1004 = vmul.f32 %v998, %v905
    %v1005 = vmul.f32 %v999, %v906
    %v1006 = vmul.f32 %v1000, %v907
    %v1007 = vadd.f32 %v1001, %v916
    %v1008 = vadd.f32 %v1002, %v917
    %v1009 = vadd.f32 %v1003, %v918
    %v1010 = vadd.f32 %v1004, %v919
    %v1011 = vadd.f32 %v1005, %v920
    %v1012 = vadd.f32 %v1006, %v921
    %v1013 = vsel %vm61, %v1007, 0.0
    %v1014 = vsel %vm62, %v1008, 0.0
    %v1015 = vsel %vm63, %v1009, 0.0
    %v1016 = vsel %vm64, %v1010, 0.0
    %v1017 = vsel %vm65, %v1011, 0.0
    %v1018 = vsel %vm66, %v1012, 0.0
    %v1019 = vsel %vm61, 0.0, %v1007
    %v1020 = vsel %vm62, 0.0, %v1008
    %v1021 = vsel %vm63, 0.0, %v1009
    %v1022 = vsel %vm64, 0.0, %v1010
    %v1023 = vsel %vm65, 0.0, %v1011
    %v1024 = vsel %vm66, 0.0, %v1012
    %1031 = vrot.lane.b32.xlu0 %v1019, 32
    %v1032 = vpop.permute.xlu0 %1031
    %1033 = vrot.lane.b32.xlu0 %v1020, 32
    %v1034 = vpop.permute.xlu0 %1033
    %1035 = vrot.lane.b32.xlu0 %v1021, 32
    %v1036 = vpop.permute.xlu0 %1035
    %1037 = vrot.lane.b32.xlu0 %v1022, 32
    %v1038 = vpop.permute.xlu0 %1037
    %1039 = vrot.lane.b32.xlu0 %v1023, 32
    %v1040 = vpop.permute.xlu0 %1039
    %1041 = vrot.lane.b32.xlu0 %v1024, 32
    %v1042 = vpop.permute.xlu0 %1041
    %v1049 = vsel %vm103, %v1013, %v1032
    %v1050 = vsel %vm103, %v1014, %v1034
    %v1051 = vsel %vm103, %v1015, %v1036
    %v1052 = vsel %vm103, %v1016, %v1038
    %v1053 = vsel %vm103, %v1017, %v1040
    %v1054 = vsel %vm103, %v1018, %v1042
    %v1055 = vpack.c.bf16 %v1050, %v1049
    %v1056 = vpack.c.bf16 %v1052, %v1051
    %v1057 = vpack.c.bf16 %v1054, %v1053
    %v1058 = vld [vmem:[#allocation2 + $0x40] sm:$0xf]
    %v1059 = vld [vmem:[#allocation2 + $0x44] sm:$0xf]
    %v1060 = vld [vmem:[#allocation2 + $0x48] sm:$0xf]
    %v1061 = vld [vmem:[#allocation2 + $0x4c] sm:$0xf]
    %v1062 = vld [vmem:[#allocation2 + $0x50] sm:$0xf]
    %v1063 = vld [vmem:[#allocation2 + $0x54] sm:$0xf]
    %v1064 = vld [vmem:[#allocation2 + $0x58] sm:$0xf]
    %v1065 = vld [vmem:[#allocation2 + $0x5c] sm:$0xf]
    %v1074 = vunpack.c.l.b16 %v1058
    %v1075 = vunpack.c.l.b16 %v1059
    %v1076 = vunpack.c.l.b16 %v1060
    %v1077 = vunpack.c.l.b16 %v1061
    %v1078 = vunpack.c.l.b16 %v1062
    %v1079 = vunpack.c.l.b16 %v1063
    %v1080 = vunpack.c.l.b16 %v1064
    %v1081 = vunpack.c.l.b16 %v1065
    %v1082 = vpack.c.b16 %v1075, %v1074
    %v1083 = vpack.c.b16 %v1077, %v1076
    %v1084 = vpack.c.b16 %v1079, %v1078
    %v1085 = vpack.c.b16 %v1081, %v1080
    %v1091 = vsel %vm145, %v1055, 0
    %v1094 = vsel %vm145, %v1056, 0
    %v1097 = vsel %vm145, %v1057, 0
    %1099 = vmatprep.subr.bf16.mxu0 0
    %1100 = vmatpush1.bf16.msra.mxu0 0
    %1101 = vmatprep.subr.bf16.mxu0 0
    %1102 = vmatpush1.bf16.msra.mxu0 0
    %1103 = vmatprep.subr.bf16.mxu0 0
    %1104 = vmatpush1.bf16.msra.mxu0 0
    %1105 = vmatprep.subr.bf16.mxu0 0
    %1106 = vmatpush1.bf16.msra.mxu0 0
    %1107 = vmatprep.subr.bf16.mxu0 0
    %1108 = vmatpush1.bf16.msra.mxu0 %v1085
    %1109 = vmatprep.subr.bf16.mxu0 0
    %1110 = vmatpush1.bf16.msra.mxu0 %v1084
    %1111 = vmatprep.subr.bf16.mxu0 0
    %1112 = vmatpush1.bf16.msra.mxu0 %v1083
    %1113 = vmatprep.subr.bf16.mxu0 0
    %1114 = vmatpush1.bf16.msra.mxu0 %v1082
    %1115 = vmatprep.subr.bf16.mxu0 0
    %1116 = vmatpush2.bf16.msra.mxu0 0
    %1117 = vmatprep.subr.bf16.mxu0 0
    %1118 = vmatpush2.bf16.msra.mxu0 0
    %1119 = vmatprep.subr.bf16.mxu0 0
    %1120 = vmatpush2.bf16.msra.mxu0 0
    %1121 = vmatprep.subr.bf16.mxu0 0
    %1122 = vmatpush2.bf16.msra.mxu0 0
    %1123 = vmatprep.subr.bf16.mxu0 0
    %1124 = vmatpush2.bf16.msra.mxu0 0
    %1125 = vmatprep.subr.bf16.mxu0 0
    %1126 = vmatpush2.bf16.msra.mxu0 0
    %1127 = vmatprep.subr.bf16.mxu0 0
    %1128 = vmatpush2.bf16.msra.mxu0 0
    %1129 = vmatprep.subr.bf16.mxu0 0
    %1130 = vmatpush2.bf16.msra.mxu0 0
    %1131 = vmatprep.mubr.bf16.mxu0 0
    %1132 = vmatmul.mubr.bf16.gmra.mxu0 %v1091
    %v1133 = vpop.f32.mrf.mxu0
    %v1134 = vadd.f32 0.0, %v1133
    %v1135 = vpop.f32.mrf.mxu0
    %v1136 = vpop.f32.mrf.mxu0
    %v1137 = vadd.f32 0.0, %v1136
    %v1138 = vpop.f32.mrf.mxu0
    %1139 = vmatprep.mubr.bf16.mxu0 0
    %1140 = vmatmul.mubr.bf16.gmra.mxu0 %v1094
    %v1141 = vpop.f32.mrf.mxu0
    %v1142 = vadd.f32 0.0, %v1141
    %v1143 = vpop.f32.mrf.mxu0
    %v1144 = vpop.f32.mrf.mxu0
    %v1145 = vadd.f32 0.0, %v1144
    %v1146 = vpop.f32.mrf.mxu0
    %1147 = vmatprep.mubr.bf16.mxu0 0
    %1148 = vmatmul.mubr.bf16.gmra.mxu0 %v1097
    %v1149 = vpop.f32.mrf.mxu0
    %v1150 = vadd.f32 0.0, %v1149
    %v1151 = vpop.f32.mrf.mxu0
    %v1152 = vpop.f32.mrf.mxu0
    %v1153 = vadd.f32 0.0, %v1152
    %v1154 = vpop.f32.mrf.mxu0
    %1155 = vdwg.mxu0
    %v1156 = vlaneseq
    %v1157 = vshrl.u32 %v1156, 7
    %v1158 = vsub.s32 2, %v1157
    %v1159 = vrot.slane %v40, %v1158
    %v1160 = vlaneseq
    %v1161 = vshrl.u32 %v1160, 7
    %v1162 = vsub.s32 2, %v1161
    %v1163 = vrot.slane %v41, %v1162
    %v1164 = vsel %vm61, %v1159, %v1163
    %v1165 = vsel %vm62, %v1159, %v1163
    %v1166 = vsel %vm63, %v1159, %v1163
    %v1167 = vsel %vm64, %v1159, %v1163
    %v1168 = vsel %vm65, %v1159, %v1163
    %v1169 = vsel %vm66, %v1159, %v1163
    %v1170 = vadd.f32 %v1134, %v1164
    %v1171 = vadd.f32 %v1137, %v1165
    %v1172 = vadd.f32 %v1142, %v1166
    %v1173 = vadd.f32 %v1145, %v1167
    %v1174 = vadd.f32 %v1150, %v1168
    %v1175 = vadd.f32 %v1153, %v1169
    %v1176 = vmul.f32 %v1170, %v1170
    %v1177 = vmul.f32 %v1171, %v1171
    %v1178 = vmul.f32 %v1172, %v1172
    %v1179 = vmul.f32 %v1173, %v1173
    %v1180 = vmul.f32 %v1174, %v1174
    %v1181 = vmul.f32 %v1175, %v1175
    %v1182 = vmul.f32 %v1170, %v1176
    %v1183 = vmul.f32 %v1171, %v1177
    %v1184 = vmul.f32 %v1172, %v1178
    %v1185 = vmul.f32 %v1173, %v1179
    %v1186 = vmul.f32 %v1174, %v1180
    %v1187 = vmul.f32 %v1175, %v1181
    %v1188 = vmul.f32 %v1182, 0.044715
    %v1189 = vmul.f32 %v1183, 0.044715
    %v1190 = vmul.f32 %v1184, 0.044715
    %v1191 = vmul.f32 %v1185, 0.044715
    %v1192 = vmul.f32 %v1186, 0.044715
    %v1193 = vmul.f32 %v1187, 0.044715
    %v1194 = vadd.f32 %v1170, %v1188
    %v1195 = vadd.f32 %v1171, %v1189
    %v1196 = vadd.f32 %v1172, %v1190
    %v1197 = vadd.f32 %v1173, %v1191
    %v1198 = vadd.f32 %v1174, %v1192
    %v1199 = vadd.f32 %v1175, %v1193
    %v1200 = vmul.f32 %v1194, 0.7978846
    %v1201 = vmul.f32 %v1195, 0.7978846
    %v1202 = vmul.f32 %v1196, 0.7978846
    %v1203 = vmul.f32 %v1197, 0.7978846
    %v1204 = vmul.f32 %v1198, 0.7978846
    %v1205 = vmul.f32 %v1199, 0.7978846
    %v1206 = vtanh.pop %v1200
    %v1207 = vtanh.pop %v1201
    %v1208 = vtanh.pop %v1202
    %v1209 = vtanh.pop %v1203
    %v1210 = vtanh.pop %v1204
    %v1211 = vtanh.pop %v1205
    %v1212 = vadd.f32 %v1206, 1.0
    %v1213 = vadd.f32 %v1207, 1.0
    %v1214 = vadd.f32 %v1208, 1.0
    %v1215 = vadd.f32 %v1209, 1.0
    %v1216 = vadd.f32 %v1210, 1.0
    %v1217 = vadd.f32 %v1211, 1.0
    %v1218 = vmul.f32 %v1212, 0.5
    %v1219 = vmul.f32 %v1213, 0.5
    %v1220 = vmul.f32 %v1214, 0.5
    %v1221 = vmul.f32 %v1215, 0.5
    %v1222 = vmul.f32 %v1216, 0.5
    %v1223 = vmul.f32 %v1217, 0.5
    %v1224 = vmul.f32 %v1170, %v1218
    %v1225 = vmul.f32 %v1171, %v1219
    %v1226 = vmul.f32 %v1172, %v1220
    %v1227 = vmul.f32 %v1173, %v1221
    %v1228 = vmul.f32 %v1174, %v1222
    %v1229 = vmul.f32 %v1175, %v1223
    %v1230 = vsel %vm61, %v1224, 0.0
    %v1231 = vsel %vm62, %v1225, 0.0
    %v1232 = vsel %vm63, %v1226, 0.0
    %v1233 = vsel %vm64, %v1227, 0.0
    %v1234 = vsel %vm65, %v1228, 0.0
    %v1235 = vsel %vm66, %v1229, 0.0
    %v1236 = vsel %vm61, 0.0, %v1224
    %v1237 = vsel %vm62, 0.0, %v1225
    %v1238 = vsel %vm63, 0.0, %v1226
    %v1239 = vsel %vm64, 0.0, %v1227
    %v1240 = vsel %vm65, 0.0, %v1228
    %v1241 = vsel %vm66, 0.0, %v1229
    %1248 = vrot.lane.b32.xlu0 %v1236, 64
    %v1249 = vpop.permute.xlu0 %1248
    %1250 = vrot.lane.b32.xlu0 %v1237, 64
    %v1251 = vpop.permute.xlu0 %1250
    %1252 = vrot.lane.b32.xlu0 %v1238, 64
    %v1253 = vpop.permute.xlu0 %1252
    %1254 = vrot.lane.b32.xlu0 %v1239, 64
    %v1255 = vpop.permute.xlu0 %1254
    %1256 = vrot.lane.b32.xlu0 %v1240, 64
    %v1257 = vpop.permute.xlu0 %1256
    %1258 = vrot.lane.b32.xlu0 %v1241, 64
    %v1259 = vpop.permute.xlu0 %1258
    %v1266 = vsel %vm145, %v1230, %v1249
    %v1267 = vsel %vm145, %v1231, %v1251
    %v1268 = vsel %vm145, %v1232, %v1253
    %v1269 = vsel %vm145, %v1233, %v1255
    %v1270 = vsel %vm145, %v1234, %v1257
    %v1271 = vsel %vm145, %v1235, %v1259
    %v1272 = vpack.c.bf16 %v1267, %v1266
    %v1273 = vpack.c.bf16 %v1269, %v1268
    %v1274 = vpack.c.bf16 %v1271, %v1270
    %v1275 = vld [vmem:[#allocation2 + $0x60] sm:$0xf]
    %v1276 = vld [vmem:[#allocation2 + $0x64] sm:$0xf]
    %v1277 = vld [vmem:[#allocation2 + $0x68] sm:$0xf]
    %v1278 = vld [vmem:[#allocation2 + $0x6c] sm:$0xf]
    %v1279 = vld [vmem:[#allocation2 + $0x70] sm:$0xf]
    %v1280 = vld [vmem:[#allocation2 + $0x74] sm:$0xf]
    %v1281 = vld [vmem:[#allocation2 + $0x78] sm:$0xf]
    %v1282 = vld [vmem:[#allocation2 + $0x7c] sm:$0xf]
    %v1283 = vld [vmem:[#allocation2 + $0x80] sm:$0xf]
    %v1284 = vld [vmem:[#allocation2 + $0x84] sm:$0xf]
    %v1285 = vld [vmem:[#allocation2 + $0x88] sm:$0xf]
    %v1286 = vld [vmem:[#allocation2 + $0x8c] sm:$0xf]
    %v1287 = vld [vmem:[#allocation2 + $0x90] sm:$0xf]
    %v1288 = vld [vmem:[#allocation2 + $0x94] sm:$0xf]
    %v1289 = vld [vmem:[#allocation2 + $0x98] sm:$0xf]
    %v1290 = vld [vmem:[#allocation2 + $0x9c] sm:$0xf]
    %v1307 = vunpack.c.l.b16 %v1275
    %v1308 = vunpack.c.l.b16 %v1276
    %v1309 = vunpack.c.l.b16 %v1277
    %v1310 = vunpack.c.l.b16 %v1278
    %v1311 = vunpack.c.l.b16 %v1279
    %v1312 = vunpack.c.l.b16 %v1280
    %v1313 = vunpack.c.l.b16 %v1281
    %v1314 = vunpack.c.l.b16 %v1282
    %v1315 = vunpack.c.l.b16 %v1283
    %v1316 = vunpack.c.l.b16 %v1284
    %v1317 = vunpack.c.l.b16 %v1285
    %v1318 = vunpack.c.l.b16 %v1286
    %v1319 = vunpack.c.l.b16 %v1287
    %v1320 = vunpack.c.l.b16 %v1288
    %v1321 = vunpack.c.l.b16 %v1289
    %v1322 = vunpack.c.l.b16 %v1290
    %v1323 = vpack.c.b16 %v1308, %v1307
    %v1324 = vpack.c.b16 %v1310, %v1309
    %v1325 = vpack.c.b16 %v1312, %v1311
    %v1326 = vpack.c.b16 %v1314, %v1313
    %v1327 = vpack.c.b16 %v1316, %v1315
    %v1328 = vpack.c.b16 %v1318, %v1317
    %v1329 = vpack.c.b16 %v1320, %v1319
    %v1330 = vpack.c.b16 %v1322, %v1321
    %1339 = vmatprep.subr.bf16.mxu0 0
    %1340 = vmatpush1.bf16.msra.mxu0 %v1330
    %1341 = vmatprep.subr.bf16.mxu0 0
    %1342 = vmatpush1.bf16.msra.mxu0 %v1329
    %1343 = vmatprep.subr.bf16.mxu0 0
    %1344 = vmatpush1.bf16.msra.mxu0 %v1328
    %1345 = vmatprep.subr.bf16.mxu0 0
    %1346 = vmatpush1.bf16.msra.mxu0 %v1327
    %1347 = vmatprep.subr.bf16.mxu0 0
    %1348 = vmatpush1.bf16.msra.mxu0 %v1326
    %1349 = vmatprep.subr.bf16.mxu0 0
    %1350 = vmatpush1.bf16.msra.mxu0 %v1325
    %1351 = vmatprep.subr.bf16.mxu0 0
    %1352 = vmatpush1.bf16.msra.mxu0 %v1324
    %1353 = vmatprep.subr.bf16.mxu0 0
    %1354 = vmatpush1.bf16.msra.mxu0 %v1323
    %1355 = vmatprep.subr.bf16.mxu0 0
    %1356 = vmatpush2.bf16.msra.mxu0 0
    %1357 = vmatprep.subr.bf16.mxu0 0
    %1358 = vmatpush2.bf16.msra.mxu0 0
    %1359 = vmatprep.subr.bf16.mxu0 0
    %1360 = vmatpush2.bf16.msra.mxu0 0
    %1361 = vmatprep.subr.bf16.mxu0 0
    %1362 = vmatpush2.bf16.msra.mxu0 0
    %1363 = vmatprep.subr.bf16.mxu0 0
    %1364 = vmatpush2.bf16.msra.mxu0 0
    %1365 = vmatprep.subr.bf16.mxu0 0
    %1366 = vmatpush2.bf16.msra.mxu0 0
    %1367 = vmatprep.subr.bf16.mxu0 0
    %1368 = vmatpush2.bf16.msra.mxu0 0
    %1369 = vmatprep.subr.bf16.mxu0 0
    %1370 = vmatpush2.bf16.msra.mxu0 0
    %1371 = vmatprep.mubr.bf16.mxu0 0
    %1372 = vmatmul.mubr.bf16.gmra.mxu0 %v1272
    %v1373 = vpop.f32.mrf.mxu0
    %v1374 = vadd.f32 0.0, %v1373
    %v1375 = vpop.f32.mrf.mxu0
    %v1376 = vpop.f32.mrf.mxu0
    %v1377 = vadd.f32 0.0, %v1376
    %v1378 = vpop.f32.mrf.mxu0
    %1379 = vmatprep.mubr.bf16.mxu0 0
    %1380 = vmatmul.mubr.bf16.gmra.mxu0 %v1273
    %v1381 = vpop.f32.mrf.mxu0
    %v1382 = vadd.f32 0.0, %v1381
    %v1383 = vpop.f32.mrf.mxu0
    %v1384 = vpop.f32.mrf.mxu0
    %v1385 = vadd.f32 0.0, %v1384
    %v1386 = vpop.f32.mrf.mxu0
    %1387 = vmatprep.mubr.bf16.mxu0 0
    %1388 = vmatmul.mubr.bf16.gmra.mxu0 %v1274
    %v1389 = vpop.f32.mrf.mxu0
    %v1390 = vadd.f32 0.0, %v1389
    %v1391 = vpop.f32.mrf.mxu0
    %v1392 = vpop.f32.mrf.mxu0
    %v1393 = vadd.f32 0.0, %v1392
    %v1394 = vpop.f32.mrf.mxu0
    %1395 = vdwg.mxu0
    %v1396 = vlaneseq
    %v1397 = vshrl.u32 %v1396, 7
    %v1398 = vsub.s32 3, %v1397
    %v1399 = vrot.slane %v40, %v1398
    %v1400 = vlaneseq
    %v1401 = vshrl.u32 %v1400, 7
    %v1402 = vsub.s32 3, %v1401
    %v1403 = vrot.slane %v41, %v1402
    %v1404 = vsel %vm61, %v1399, %v1403
    %v1405 = vsel %vm62, %v1399, %v1403
    %v1406 = vsel %vm63, %v1399, %v1403
    %v1407 = vsel %vm64, %v1399, %v1403
    %v1408 = vsel %vm65, %v1399, %v1403
    %v1409 = vsel %vm66, %v1399, %v1403
    %v1410 = vadd.f32 %v1374, %v1404
    %v1411 = vadd.f32 %v1377, %v1405
    %v1412 = vadd.f32 %v1382, %v1406
    %v1413 = vadd.f32 %v1385, %v1407
    %v1414 = vadd.f32 %v1390, %v1408
    %v1415 = vadd.f32 %v1393, %v1409
    %v1416 = vadd.f32 %v1007, %v1410
    %v1417 = vadd.f32 %v1008, %v1411
    %v1418 = vadd.f32 %v1009, %v1412
    %v1419 = vadd.f32 %v1010, %v1413
    %v1420 = vadd.f32 %v1011, %v1414
    %v1421 = vadd.f32 %v1012, %v1415
    %v1422 = vlaneseq
    %v1423 = vshrl.u32 %v1422, 7
    %v1424 = vsub.s32 6, %v1423
    %v1425 = vrot.slane %v40, %v1424
    %v1426 = vlaneseq
    %v1427 = vshrl.u32 %v1426, 7
    %v1428 = vsub.s32 6, %v1427
    %v1429 = vrot.slane %v41, %v1428
    %v1430 = vsel %vm61, %v1425, %v1429
    %v1431 = vsel %vm62, %v1425, %v1429
    %v1432 = vsel %vm63, %v1425, %v1429
    %v1433 = vsel %vm64, %v1425, %v1429
    %v1434 = vsel %vm65, %v1425, %v1429
    %v1435 = vsel %vm66, %v1425, %v1429
    %v1436 = vlaneseq
    %v1437 = vshrl.u32 %v1436, 7
    %v1438 = vsub.s32 7, %v1437
    %v1439 = vrot.slane %v40, %v1438
    %v1440 = vlaneseq
    %v1441 = vshrl.u32 %v1440, 7
    %v1442 = vsub.s32 7, %v1441
    %v1443 = vrot.slane %v41, %v1442
    %v1444 = vsel %vm61, %v1439, %v1443
    %v1445 = vsel %vm62, %v1439, %v1443
    %v1446 = vsel %vm63, %v1439, %v1443
    %v1447 = vsel %vm64, %v1439, %v1443
    %v1448 = vsel %vm65, %v1439, %v1443
    %v1449 = vsel %vm66, %v1439, %v1443
    %v1450 = vsel %vm103, %v1416, 0.0
    %1451 = vadd.xlane.f32.xlu0 %v1450
    %v1452 = vpop.xlane.xlu0 %1451
    %v1453 = vsel %vm103, %v1417, 0.0
    %1454 = vadd.xlane.f32.xlu0 %v1453
    %v1455 = vpop.xlane.xlu0 %1454
    %v1456 = vsel %vm103, %v1418, 0.0
    %1457 = vadd.xlane.f32.xlu0 %v1456
    %v1458 = vpop.xlane.xlu0 %1457
    %v1459 = vsel %vm103, %v1419, 0.0
    %1460 = vadd.xlane.f32.xlu0 %v1459
    %v1461 = vpop.xlane.xlu0 %1460
    %v1462 = vsel %vm103, %v1420, 0.0
    %1463 = vadd.xlane.f32.xlu0 %v1462
    %v1464 = vpop.xlane.xlu0 %1463
    %v1465 = vsel %vm103, %v1421, 0.0
    %1466 = vadd.xlane.f32.xlu0 %v1465
    %v1467 = vpop.xlane.xlu0 %1466
    %v1468 = vmul.f32 %v1452, %v940
    %v1469 = vmul.f32 %v1455, %v940
    %v1470 = vmul.f32 %v1458, %v940
    %v1471 = vmul.f32 %v1461, %v940
    %v1472 = vmul.f32 %v1464, %v940
    %v1473 = vmul.f32 %v1467, %v940
    %v1474 = vsub.f32 %v1416, %v1468
    %v1475 = vsub.f32 %v1417, %v1469
    %v1476 = vsub.f32 %v1418, %v1470
    %v1477 = vsub.f32 %v1419, %v1471
    %v1478 = vsub.f32 %v1420, %v1472
    %v1479 = vsub.f32 %v1421, %v1473
    %v1480 = vmul.f32 %v1474, %v1474
    %v1481 = vmul.f32 %v1475, %v1475
    %v1482 = vmul.f32 %v1476, %v1476
    %v1483 = vmul.f32 %v1477, %v1477
    %v1484 = vmul.f32 %v1478, %v1478
    %v1485 = vmul.f32 %v1479, %v1479
    %v1486 = vsel %vm103, %v1480, 0.0
    %1487 = vadd.xlane.f32.xlu0 %v1486
    %v1488 = vpop.xlane.xlu0 %1487
    %v1489 = vsel %vm103, %v1481, 0.0
    %1490 = vadd.xlane.f32.xlu0 %v1489
    %v1491 = vpop.xlane.xlu0 %1490
    %v1492 = vsel %vm103, %v1482, 0.0
    %1493 = vadd.xlane.f32.xlu0 %v1492
    %v1494 = vpop.xlane.xlu0 %1493
    %v1495 = vsel %vm103, %v1483, 0.0
    %1496 = vadd.xlane.f32.xlu0 %v1495
    %v1497 = vpop.xlane.xlu0 %1496
    %v1498 = vsel %vm103, %v1484, 0.0
    %1499 = vadd.xlane.f32.xlu0 %v1498
    %v1500 = vpop.xlane.xlu0 %1499
    %v1501 = vsel %vm103, %v1485, 0.0
    %1502 = vadd.xlane.f32.xlu0 %v1501
    %v1503 = vpop.xlane.xlu0 %1502
    %v1504 = vmul.f32 %v1488, %v940
    %v1505 = vmul.f32 %v1491, %v940
    %v1506 = vmul.f32 %v1494, %v940
    %v1507 = vmul.f32 %v1497, %v940
    %v1508 = vmul.f32 %v1500, %v940
    %v1509 = vmul.f32 %v1503, %v940
    %v1510 = vadd.f32 %v1504, 1e-05
    %v1511 = vadd.f32 %v1505, 1e-05
    %v1512 = vadd.f32 %v1506, 1e-05
    %v1513 = vadd.f32 %v1507, 1e-05
    %v1514 = vadd.f32 %v1508, 1e-05
    %v1515 = vadd.f32 %v1509, 1e-05
    %v1516 = vrsqrt.pop %v1510
    %v1517 = vrsqrt.pop %v1511
    %v1518 = vrsqrt.pop %v1512
    %v1519 = vrsqrt.pop %v1513
    %v1520 = vrsqrt.pop %v1514
    %v1521 = vrsqrt.pop %v1515
    %v1522 = vmul.f32 %v1474, %v1516
    %v1523 = vmul.f32 %v1475, %v1517
    %v1524 = vmul.f32 %v1476, %v1518
    %v1525 = vmul.f32 %v1477, %v1519
    %v1526 = vmul.f32 %v1478, %v1520
    %v1527 = vmul.f32 %v1479, %v1521
    %v1528 = vmul.f32 %v1522, %v1430
    %v1529 = vmul.f32 %v1523, %v1431
    %v1530 = vmul.f32 %v1524, %v1432
    %v1531 = vmul.f32 %v1525, %v1433
    %v1532 = vmul.f32 %v1526, %v1434
    %v1533 = vmul.f32 %v1527, %v1435
    %v1534 = vadd.f32 %v1528, %v1444
    %v1535 = vadd.f32 %v1529, %v1445
    %v1536 = vadd.f32 %v1530, %v1446
    %v1537 = vadd.f32 %v1531, %v1447
    %v1538 = vadd.f32 %v1532, %v1448
    %v1539 = vadd.f32 %v1533, %v1449
    %v1540 = vsel %vm103, %v1534, 0.0
    %v1541 = vrot.slane %v1540, 4
    %v1542 = vadd.f32 %v1540, %v1541
    %v1543 = vrot.slane %v1542, 2
    %v1544 = vadd.f32 %v1542, %v1543
    %v1545 = vrot.slane %v1544, 1
    %v1546 = vadd.f32 %v1544, %v1545
    %v1547 = vrcp.pop 8.0
    %v1548 = vmul.f32 %v1546, %v1547
    %v1549 = vsel %vm103, %v1536, 0.0
    %v1550 = vsel %vm103, %v1537, 0.0
    %v1551 = vadd.f32 %v1549, %v1550
    %v1552 = vrot.slane %v1551, 4
    %v1553 = vadd.f32 %v1551, %v1552
    %v1554 = vrot.slane %v1553, 2
    %v1555 = vadd.f32 %v1553, %v1554
    %v1556 = vrot.slane %v1555, 1
    %v1557 = vadd.f32 %v1555, %v1556
    %v1558 = vrcp.pop 16.0
    %v1559 = vmul.f32 %v1557, %v1558
    %v1560 = vmul.f32 %v1548, %v1559
    %v1561 = vsel %vm103, %v1560, 0.0
    %1562 = vadd.xlane.f32.xlu0 %v1561
    %v1563 = vpop.xlane.xlu0 %1562
    %v1564 = vmul.f32 %v1548, %v1548
    %v1565 = vsel %vm103, %v1564, 0.0
    %1566 = vadd.xlane.f32.xlu0 %v1565
    %v1567 = vpop.xlane.xlu0 %1566
    %v1568 = vrsqrt.pop %v1567
    %v1569 = vmul.f32 %v1567, %v1568
    %vm1570 = vcmp.eq.f32.partialorder %v1567, inf
    %v1571 = vsel %vm1570, %v1567, %v1569
    %vm1572 = vcmp.eq.f32.partialorder %v1567, 0.0
    %v1573 = vand.u32 %v1567, 2147483648
    %v1574 = vsel %vm1572, %v1573, %v1571
    %v1575 = vmul.f32 %v1559, %v1559
    %v1576 = vsel %vm103, %v1575, 0.0
    %1577 = vadd.xlane.f32.xlu0 %v1576
    %v1578 = vpop.xlane.xlu0 %1577
    %v1579 = vrsqrt.pop %v1578
    %v1580 = vmul.f32 %v1578, %v1579
    %vm1581 = vcmp.eq.f32.partialorder %v1578, inf
    %v1582 = vsel %vm1581, %v1578, %v1580
    %vm1583 = vcmp.eq.f32.partialorder %v1578, 0.0
    %v1584 = vand.u32 %v1578, 2147483648
    %v1585 = vsel %vm1583, %v1584, %v1582
    %v1586 = vmul.f32 %v1574, %v1585
    %v1587 = vmax.f32 %v1586, 1e-08
    %v1588 = vrcp.pop %v1587
    %v1589 = vmul.f32 %v1563, %v1588
    %v1590 = vsel %vm103, %v1535, 0.0
    %v1591 = vrot.slane %v1590, 4
    %v1592 = vadd.f32 %v1590, %v1591
    %v1593 = vrot.slane %v1592, 2
    %v1594 = vadd.f32 %v1592, %v1593
    %v1595 = vrot.slane %v1594, 1
    %v1596 = vadd.f32 %v1594, %v1595
    %v1597 = vmul.f32 %v1596, %v1547
    %v1598 = vsel %vm103, %v1538, 0.0
    %v1599 = vsel %vm103, %v1539, 0.0
    %v1600 = vadd.f32 %v1598, %v1599
    %v1601 = vrot.slane %v1600, 4
    %v1602 = vadd.f32 %v1600, %v1601
    %v1603 = vrot.slane %v1602, 2
    %v1604 = vadd.f32 %v1602, %v1603
    %v1605 = vrot.slane %v1604, 1
    %v1606 = vadd.f32 %v1604, %v1605
    %v1607 = vmul.f32 %v1606, %v1558
    %v1608 = vmul.f32 %v1597, %v1607
    %v1609 = vsel %vm103, %v1608, 0.0
    %1610 = vadd.xlane.f32.xlu0 %v1609
    %v1611 = vpop.xlane.xlu0 %1610
    %v1612 = vmul.f32 %v1597, %v1597
    %v1613 = vsel %vm103, %v1612, 0.0
    %1614 = vadd.xlane.f32.xlu0 %v1613
    %v1615 = vpop.xlane.xlu0 %1614
    %v1616 = vrsqrt.pop %v1615
    %v1617 = vmul.f32 %v1615, %v1616
    %vm1618 = vcmp.eq.f32.partialorder %v1615, inf
    %v1619 = vsel %vm1618, %v1615, %v1617
    %vm1620 = vcmp.eq.f32.partialorder %v1615, 0.0
    %v1621 = vand.u32 %v1615, 2147483648
    %v1622 = vsel %vm1620, %v1621, %v1619
    %v1623 = vmul.f32 %v1607, %v1607
    %v1624 = vsel %vm103, %v1623, 0.0
    %1625 = vadd.xlane.f32.xlu0 %v1624
    %v1626 = vpop.xlane.xlu0 %1625
    %v1627 = vrsqrt.pop %v1626
    %v1628 = vmul.f32 %v1626, %v1627
    %vm1629 = vcmp.eq.f32.partialorder %v1626, inf
    %v1630 = vsel %vm1629, %v1626, %v1628
    %vm1631 = vcmp.eq.f32.partialorder %v1626, 0.0
    %v1632 = vand.u32 %v1626, 2147483648
    %v1633 = vsel %vm1631, %v1632, %v1630
    %v1634 = vmul.f32 %v1622, %v1633
    %v1635 = vmax.f32 %v1634, 1e-08
    %v1636 = vrcp.pop %v1635
    %v1637 = vmul.f32 %v1611, %v1636
    %vm1638 = vcmask 1040384
    %v1639 = vsel %vm1638, %v1589, %v1637
    %1640 = vst [vmem:[#allocation5] sm:$0x3] %v1639
    // Predicated region
    $region22: #{tpu_custom_call.1} parent=1 // pred_check
      _
    $region23: #{tpu_custom_call.1} parent=1 // pred_check_branch
      %1642 = sbr.rel (0) target = $region25
    $region24: #{tpu_custom_call.1} parent=1 // pred_region
      %s1644 = ssub.s32 32, 32
      %1645 = vsyncadd [#allocation4], %s1644
      %s1647 = sshll.u32 [#allocation5], 4
      %s1648 = int_to_ptr.vmem [resolvable:$true] %s1647
      %1650 = dma.vmem_to_hbm [thread:$0]  %s1648, 32, %s4, [#allocation4]
    $region25: #{tpu_custom_call.1} parent=1 // pred_fallthru
      _
    // Predicated region
    $region26: #{tpu_custom_call.1} parent=1 // pred_check
      _
    $region27: #{tpu_custom_call.1} parent=1 // pred_check_branch
      %1652 = sbr.rel (0) target = $region29
    $region28: #{tpu_custom_call.1} parent=1 // pred_region
      %1653 = dma.done [#allocation4], 32
    $region29: #{tpu_custom_call.1} parent=1 // pred_fallthru
      _
    %1654 = vsyncpa [#allocation3], 1
    %1655 = vsyncpa [#allocation4], 1

</llo_original>
